<compile_context>
chip_gen: v6e
topology: v6e:2x2x1
jax: 0.10.0
libtpu: 0.0.40
codegen_flags: <defaults>
</compile_context>

<pallas_src>
import math
import functools

import jax
import jax.numpy as jnp
import numpy as np
from jax.experimental import pallas as pl
from jax.experimental.pallas import tpu as pltpu

# ---- model hyper-parameters (small, consistent with the module) ----
D_MODEL = 32          # d_model
NHEAD = 4             # nhead
HEAD_DIM = D_MODEL // NHEAD
DIM_FF = 64           # dim_feedforward
SEQ = 8               # N (number of tokens)
BATCH = 2             # B
LN_EPS = 1e-5

# prow row layout (all rows are C-wide)
_R_BQ, _R_BK, _R_BV, _R_BO, _R_G1, _R_BE1, _R_B2, _R_G2, _R_BE2 = range(9)


def _encoder_layer_kernel(
    x_ref,        # (N, C)   src for this batch element (== sgdt_output['x'])
    pos_ref,      # (N, C)   positional embedding
    wqk_ref,      # (C, 2C)  [Wq*scale | Wk], lane-concatenated
    wv_ref,       # (C, C)
    wo_ref,       # (C, C)   output projection
    w1_ref,       # (C, FF)
    b1_ref,       # (1, FF)
    w2_ref,       # (FF, C)
    prow_ref,     # (16, C)  rows: bq*scale, bk, bv, bo, g1, be1, b2, g2, be2, pad
    out_ref,      # (N, C)
    *, nhead,
):
    C = x_ref.shape[1]
    hd = C // nhead

    x = x_ref[...]                     # src (identity SGDT adaptation)
    x_pos = x + pos_ref[...]           # q_in == k_in == src + pos (computed once)

    # --- fused QKV projections (2 wide MXU pushes instead of 12 narrow ones) ---
    qk = jnp.dot(x_pos, wqk_ref[...], preferred_element_type=jnp.float32)   # (N, 2C)
    q = qk[:, :C] + prow_ref[_R_BQ:_R_BQ + 1, :]     # scale already folded in
    k = qk[:, C:] + prow_ref[_R_BK:_R_BK + 1, :]
    v = jnp.dot(x, wv_ref[...],
                preferred_element_type=jnp.float32) + prow_ref[_R_BV:_R_BV + 1, :]

    # --- per-head attention; heads selected by static lane slices, results
    #     lane-concatenated back to (N, C) for ONE output-projection matmul ---
    heads = []
    for h in range(nhead):
        lo = h * hd
        qh = q[:, lo:lo + hd]
        kh = k[:, lo:lo + hd]
        vh = v[:, lo:lo + hd]

        s = jax.lax.dot_general(qh, kh, (((1,), (1,)), ((), ())),
                                preferred_element_type=jnp.float32)          # (N, N)
        s = s - jnp.max(s, axis=-1, keepdims=True)
        p = jnp.exp(s)
        p = p * pl.reciprocal(jnp.sum(p, axis=-1, keepdims=True), approx=True)
        heads.append(jnp.dot(p, vh, preferred_element_type=jnp.float32))     # (N, hd)

    o = jnp.concatenate(heads, axis=-1)                                      # (N, C)
    src2 = jnp.dot(o, wo_ref[...],
                   preferred_element_type=jnp.float32) + prow_ref[_R_BO:_R_BO + 1, :]

    def layer_norm(vv, g, b):
        mu = jnp.mean(vv, axis=-1, keepdims=True)
        vc = vv - mu
        var = jnp.mean(vc * vc, axis=-1, keepdims=True)
        return vc * jax.lax.rsqrt(var + LN_EPS) * g + b

    # --- residual + norm1 (residual uses sgdt_output['x'] == src == x) ---
    xn = layer_norm(x + src2,
                    prow_ref[_R_G1:_R_G1 + 1, :], prow_ref[_R_BE1:_R_BE1 + 1, :])

    # --- feed-forward: linear2(relu(linear1(xn))) ---
    h1 = jnp.dot(xn, w1_ref[...], preferred_element_type=jnp.float32) + b1_ref[...]
    h1 = jnp.maximum(h1, 0.0)
    ff = jnp.dot(h1, w2_ref[...],
                 preferred_element_type=jnp.float32) + prow_ref[_R_B2:_R_B2 + 1, :]

    # --- residual + norm2 ---
    out = layer_norm(xn + ff,
                     prow_ref[_R_G2:_R_G2 + 1, :], prow_ref[_R_BE2:_R_BE2 + 1, :])
    out_ref[...] = out.astype(out_ref.dtype)


def transformer_encoder_sgdt_layer(src_nbc, pos_nbc, params):
    """src_nbc, pos_nbc: (N, B, C) as in the PyTorch module. Returns (N, B, C)."""
    N, B, C = src_nbc.shape
    H = NHEAD
    hd = C // H
    F = params["w1"].shape[0]

    # Batch-major layout for the per-batch grid.
    src = jnp.transpose(src_nbc, (1, 0, 2))    # (B, N, C)
    pos = jnp.transpose(pos_nbc, (1, 0, 2))

    # One-time parameter prep (glue, not hot path):
    #   * transpose so kernel does plain x @ W
    #   * fuse Wq|Wk lane-wise; fold 1/sqrt(head_dim) into Wq / bq
    #   * all C-wide bias / LN vectors packed into one (16, C) row array
    scale = 1.0 / math.sqrt(hd)
    wqk = jnp.concatenate([params["wq"].T * scale, params["wk"].T], axis=1)  # (C, 2C)
    wv = params["wv"].T                                                      # (C, C)
    wo = params["wo"].T                                                      # (C, C)
    w1 = params["w1"].T                                                      # (C, FF)
    w2 = params["w2"].T                                                      # (FF, C)
    b1 = params["b1"].reshape(1, F)                                          # (1, FF)

    rows = [params["bq"] * scale, params["bk"], params["bv"], params["bo"],
            params["g1"], params["be1"], params["b2"], params["g2"], params["be2"]]
    rows += [jnp.zeros((C,), jnp.float32)] * ((-len(rows)) % 8)              # pad to 16
    prow = jnp.stack(rows, axis=0)                                           # (16, C)

    kernel = functools.partial(_encoder_layer_kernel, nhead=H)

    def full_spec(shape):
        return pl.BlockSpec(shape, lambda b, _s=shape: tuple(0 for _ in _s))

    out = pl.pallas_call(
        kernel,
        out_shape=jax.ShapeDtypeStruct((B, N, C), src.dtype),
        grid=(B,),
        in_specs=[
            pl.BlockSpec((None, N, C), lambda b: (b, 0, 0)),   # src  (squeezed batch)
            pl.BlockSpec((None, N, C), lambda b: (b, 0, 0)),   # pos
            full_spec(wqk.shape),
            full_spec(wv.shape),
            full_spec(wo.shape),
            full_spec(w1.shape),
            full_spec(b1.shape),
            full_spec(w2.shape),
            full_spec(prow.shape),
        ],
        out_specs=pl.BlockSpec((None, N, C), lambda b: (b, 0, 0)),
        compiler_params=pltpu.CompilerParams(
            dimension_semantics=("parallel",)),    # v7x: shard batch over 2 TCs
    )(src, pos, wqk, wv, wo, w1, b1, w2, prow)

    return jnp.transpose(out, (1, 0, 2))           # back to (N, B, C)


# ------------------------- pure-JAX reference ------------------------------
def _reference(src_nbc, pos_nbc, params):
    src = jnp.transpose(src_nbc, (1, 0, 2))      # (B, N, C)
    pos = jnp.transpose(pos_nbc, (1, 0, 2))

    def one(s, p):
        q_in = s + p
        k_in = s + p
        q = q_in @ params["wq"].T + params["bq"]
        k = k_in @ params["wk"].T + params["bk"]
        v = s @ params["wv"].T + params["bv"]
        qh = q.reshape(SEQ, NHEAD, HEAD_DIM).transpose(1, 0, 2) / math.sqrt(HEAD_DIM)
        kh = k.reshape(SEQ, NHEAD, HEAD_DIM).transpose(1, 0, 2)
        vh = v.reshape(SEQ, NHEAD, HEAD_DIM).transpose(1, 0, 2)
        scores = jnp.einsum("hqd,hkd->hqk", qh, kh)
        attn = jax.nn.softmax(scores, axis=-1)
        o = jnp.einsum("hqk,hkd->hqd", attn, vh).transpose(1, 0, 2).reshape(SEQ, D_MODEL)
        src2 = o @ params["wo"].T + params["bo"]
        x = s + src2
        x = (x - x.mean(-1, keepdims=True)) / jnp.sqrt(x.var(-1, keepdims=True) + LN_EPS)
        x = x * params["g1"] + params["be1"]
        ff = jax.nn.relu(x @ params["w1"].T + params["b1"]) @ params["w2"].T + params["b2"]
        y = x + ff
        y = (y - y.mean(-1, keepdims=True)) / jnp.sqrt(y.var(-1, keepdims=True) + LN_EPS)
        y = y * params["g2"] + params["be2"]
        return y

    out = jax.vmap(one)(src, pos)
    return jnp.transpose(out, (1, 0, 2))


# ------------------------------- main ---------------------------------------
def _init_params(key):
    ks = jax.random.split(key, 10)
    C, F = D_MODEL, DIM_FF
    s = 0.1
    # Packed in_proj (3C, C) split into q/k/v, matching nn.MultiheadAttention.
    in_proj_w = jax.random.normal(ks[0], (3 * C, C), jnp.float32) * s
    in_proj_b = jax.random.normal(ks[1], (3 * C,), jnp.float32) * s
    params = dict(
        wq=in_proj_w[:C], wk=in_proj_w[C:2 * C], wv=in_proj_w[2 * C:],
        bq=in_proj_b[:C], bk=in_proj_b[C:2 * C], bv=in_proj_b[2 * C:],
        wo=jax.random.normal(ks[2], (C, C), jnp.float32) * s,
        bo=jax.random.normal(ks[3], (C,), jnp.float32) * s,
        w1=jax.random.normal(ks[4], (F, C), jnp.float32) * s,
        b1=jax.random.normal(ks[5], (F,), jnp.float32) * s,
        w2=jax.random.normal(ks[6], (C, F), jnp.float32) * s,
        b2=jax.random.normal(ks[7], (C,), jnp.float32) * s,
        g1=jnp.ones((C,), jnp.float32), be1=jnp.zeros((C,), jnp.float32),
        g2=jnp.ones((C,), jnp.float32), be2=jnp.zeros((C,), jnp.float32),
    )
    return params


if __name__ == "__main__":
    key = jax.random.PRNGKey(0)
    k_src, k_pos, k_par = jax.random.split(key, 3)

    src = jax.random.normal(k_src, (SEQ, BATCH, D_MODEL), jnp.float32)   # (N, B, C)
    pos = jax.random.normal(k_pos, (SEQ, BATCH, D_MODEL), jnp.float32)   # sine pos embed (non-learnable)
    params = _init_params(k_par)

    out = transformer_encoder_sgdt_layer(src, pos, params)
    out = jax.block_until_ready(out)

    ref = jax.block_until_ready(_reference(src, pos, params))
    assert out.shape == (SEQ, BATCH, D_MODEL)
    # Tolerance slightly relaxed vs. exact f32 because the softmax denominator
    # uses the approximate EUP reciprocal (pl.reciprocal(approx=True)).
    np.testing.assert_allclose(np.asarray(out), np.asarray(ref), atol=2e-3, rtol=2e-3)

    # sgdt_output dict as the module returns (identity SGDT adaptation).
    sgdt_output = {
        "x": src,
        "tokens_small_obj": jnp.zeros((SEQ, BATCH), jnp.int32),
        "tokens_to_discard": jnp.zeros((SEQ, BATCH), jnp.int32),
        "adapted_pos": True,
    }
    _ = sgdt_output

    print("KERNEL_OK")
</pallas_src>

<mosaic_0001>
module attributes {stable_mosaic.version = 11 : i64} {
  func.func @_encoder_layer_kernel(%arg0: i32, %arg1: memref<1x8x32xf32, #tpu.memory_space<vmem>>, %arg2: memref<1x8x32xf32, #tpu.memory_space<vmem>>, %arg3: memref<32x64xf32, #tpu.memory_space<vmem>>, %arg4: memref<32x32xf32, #tpu.memory_space<vmem>>, %arg5: memref<32x32xf32, #tpu.memory_space<vmem>>, %arg6: memref<32x64xf32, #tpu.memory_space<vmem>>, %arg7: memref<1x64xf32, #tpu.memory_space<vmem>>, %arg8: memref<64x32xf32, #tpu.memory_space<vmem>>, %arg9: memref<16x32xf32, #tpu.memory_space<vmem>>, %arg10: memref<1x8x32xf32, #tpu.memory_space<vmem>>) attributes {dimension_semantics = [#tpu.dimension_semantics<parallel>], iteration_bounds = array<i64: 2>, scalar_prefetch = 0 : i64, scratch_operands = 0 : i64, tpu.core_type = #tpu.core_type<tc>, window_params = [{transform_indices = @transform_0, window_bounds = array<i64: 1, 8, 32>}, {transform_indices = @transform_1, window_bounds = array<i64: 1, 8, 32>}, {pipeline_mode = #tpu.pipeline_mode<synchronous>, transform_indices = @transform_2, window_bounds = array<i64: 32, 64>}, {pipeline_mode = #tpu.pipeline_mode<synchronous>, transform_indices = @transform_3, window_bounds = array<i64: 32, 32>}, {pipeline_mode = #tpu.pipeline_mode<synchronous>, transform_indices = @transform_4, window_bounds = array<i64: 32, 32>}, {pipeline_mode = #tpu.pipeline_mode<synchronous>, transform_indices = @transform_5, window_bounds = array<i64: 32, 64>}, {pipeline_mode = #tpu.pipeline_mode<synchronous>, transform_indices = @transform_6, window_bounds = array<i64: 1, 64>}, {pipeline_mode = #tpu.pipeline_mode<synchronous>, transform_indices = @transform_7, window_bounds = array<i64: 64, 32>}, {pipeline_mode = #tpu.pipeline_mode<synchronous>, transform_indices = @transform_8, window_bounds = array<i64: 16, 32>}, {transform_indices = @transform_9, window_bounds = array<i64: 1, 8, 32>}]} {
    %c0 = arith.constant 0 : index
    %c0_0 = arith.constant 0 : index
    %c0_1 = arith.constant 0 : index
    %0 = vector.load %arg1[%c0, %c0_0, %c0_1] : memref<1x8x32xf32, #tpu.memory_space<vmem>>, vector<1x8x32xf32>
    %1 = vector.shape_cast %0 : vector<1x8x32xf32> to vector<8x32xf32>
    %c0_2 = arith.constant 0 : index
    %c0_3 = arith.constant 0 : index
    %c0_4 = arith.constant 0 : index
    %2 = vector.load %arg2[%c0_2, %c0_3, %c0_4] : memref<1x8x32xf32, #tpu.memory_space<vmem>>, vector<1x8x32xf32>
    %3 = vector.shape_cast %2 : vector<1x8x32xf32> to vector<8x32xf32>
    %4 = arith.addf %1, %3 : vector<8x32xf32>
    %c0_5 = arith.constant 0 : index
    %c0_6 = arith.constant 0 : index
    %5 = vector.load %arg3[%c0_5, %c0_6] : memref<32x64xf32, #tpu.memory_space<vmem>>, vector<32x64xf32>
    %cst = arith.constant dense<0.000000e+00> : vector<8x64xf32>
    %6 = tpu.matmul %4, %5, %cst {dimension_numbers = #tpu.dot_dimension_numbers<[1], [0], [0], [1], [0, 0, 1, 1], [], []>} : vector<8x32xf32>, vector<32x64xf32>, vector<8x64xf32> -> vector<8x64xf32>
    %7 = vector.extract_strided_slice %6 {offsets = [0, 0], sizes = [8, 32], strides = [1, 1]} : vector<8x64xf32> to vector<8x32xf32>
    %c0_7 = arith.constant 0 : index
    %c0_8 = arith.constant 0 : index
    %8 = vector.load %arg9[%c0_7, %c0_8] : memref<16x32xf32, #tpu.memory_space<vmem>>, vector<1x32xf32>
    %9 = vector.broadcast %8 : vector<1x32xf32> to vector<8x32xf32>
    %10 = arith.addf %7, %9 : vector<8x32xf32>
    %11 = vector.extract_strided_slice %6 {offsets = [0, 32], sizes = [8, 32], strides = [1, 1]} : vector<8x64xf32> to vector<8x32xf32>
    %c1 = arith.constant 1 : index
    %c0_9 = arith.constant 0 : index
    %12 = vector.load %arg9[%c1, %c0_9] : memref<16x32xf32, #tpu.memory_space<vmem>>, vector<1x32xf32>
    %13 = vector.broadcast %12 : vector<1x32xf32> to vector<8x32xf32>
    %14 = arith.addf %11, %13 : vector<8x32xf32>
    %c0_10 = arith.constant 0 : index
    %c0_11 = arith.constant 0 : index
    %15 = vector.load %arg4[%c0_10, %c0_11] : memref<32x32xf32, #tpu.memory_space<vmem>>, vector<32x32xf32>
    %cst_12 = arith.constant dense<0.000000e+00> : vector<8x32xf32>
    %16 = tpu.matmul %1, %15, %cst_12 {dimension_numbers = #tpu.dot_dimension_numbers<[1], [0], [0], [1], [0, 0, 1, 1], [], []>} : vector<8x32xf32>, vector<32x32xf32>, vector<8x32xf32> -> vector<8x32xf32>
    %c2 = arith.constant 2 : index
    %c0_13 = arith.constant 0 : index
    %17 = vector.load %arg9[%c2, %c0_13] : memref<16x32xf32, #tpu.memory_space<vmem>>, vector<1x32xf32>
    %18 = vector.broadcast %17 : vector<1x32xf32> to vector<8x32xf32>
    %19 = arith.addf %16, %18 : vector<8x32xf32>
    %20 = vector.extract_strided_slice %10 {offsets = [0, 0], sizes = [8, 8], strides = [1, 1]} : vector<8x32xf32> to vector<8x8xf32>
    %21 = vector.extract_strided_slice %14 {offsets = [0, 0], sizes = [8, 8], strides = [1, 1]} : vector<8x32xf32> to vector<8x8xf32>
    %22 = vector.extract_strided_slice %19 {offsets = [0, 0], sizes = [8, 8], strides = [1, 1]} : vector<8x32xf32> to vector<8x8xf32>
    %cst_14 = arith.constant dense<0.000000e+00> : vector<8x8xf32>
    %23 = tpu.matmul %20, %21, %cst_14 {dimension_numbers = #tpu.dot_dimension_numbers<[1], [1], [0], [0], [0, 0, 1, 0], [], []>} : vector<8x8xf32>, vector<8x8xf32>, vector<8x8xf32> -> vector<8x8xf32>
    %cst_15 = arith.constant dense<0xFF800000> : vector<8xf32>
    %24 = vector.multi_reduction <maximumf>, %23, %cst_15 [1] : vector<8x8xf32> to vector<8xf32>
    %25 = vector.shape_cast %24 : vector<8xf32> to vector<8x1xf32>
    %26 = vector.broadcast %25 : vector<8x1xf32> to vector<8x8xf32>
    %27 = arith.subf %23, %26 : vector<8x8xf32>
    %28 = math.exp %27 : vector<8x8xf32>
    %cst_16 = arith.constant dense<0.000000e+00> : vector<8xf32>
    %29 = vector.multi_reduction <add>, %28, %cst_16 [1] : vector<8x8xf32> to vector<8xf32>
    %30 = vector.shape_cast %29 : vector<8xf32> to vector<8x1xf32>
    %31 = tpu.reciprocal %30 {approx = true} : vector<8x1xf32> -> vector<8x1xf32>
    %32 = vector.broadcast %31 : vector<8x1xf32> to vector<8x8xf32>
    %33 = arith.mulf %28, %32 : vector<8x8xf32>
    %cst_17 = arith.constant dense<0.000000e+00> : vector<8x8xf32>
    %34 = tpu.matmul %33, %22, %cst_17 {dimension_numbers = #tpu.dot_dimension_numbers<[1], [0], [0], [1], [0, 0, 1, 1], [], []>} : vector<8x8xf32>, vector<8x8xf32>, vector<8x8xf32> -> vector<8x8xf32>
    %35 = vector.extract_strided_slice %10 {offsets = [0, 8], sizes = [8, 8], strides = [1, 1]} : vector<8x32xf32> to vector<8x8xf32>
    %36 = vector.extract_strided_slice %14 {offsets = [0, 8], sizes = [8, 8], strides = [1, 1]} : vector<8x32xf32> to vector<8x8xf32>
    %37 = vector.extract_strided_slice %19 {offsets = [0, 8], sizes = [8, 8], strides = [1, 1]} : vector<8x32xf32> to vector<8x8xf32>
    %cst_18 = arith.constant dense<0.000000e+00> : vector<8x8xf32>
    %38 = tpu.matmul %35, %36, %cst_18 {dimension_numbers = #tpu.dot_dimension_numbers<[1], [1], [0], [0], [0, 0, 1, 0], [], []>} : vector<8x8xf32>, vector<8x8xf32>, vector<8x8xf32> -> vector<8x8xf32>
    %cst_19 = arith.constant dense<0xFF800000> : vector<8xf32>
    %39 = vector.multi_reduction <maximumf>, %38, %cst_19 [1] : vector<8x8xf32> to vector<8xf32>
    %40 = vector.shape_cast %39 : vector<8xf32> to vector<8x1xf32>
    %41 = vector.broadcast %40 : vector<8x1xf32> to vector<8x8xf32>
    %42 = arith.subf %38, %41 : vector<8x8xf32>
    %43 = math.exp %42 : vector<8x8xf32>
    %cst_20 = arith.constant dense<0.000000e+00> : vector<8xf32>
    %44 = vector.multi_reduction <add>, %43, %cst_20 [1] : vector<8x8xf32> to vector<8xf32>
    %45 = vector.shape_cast %44 : vector<8xf32> to vector<8x1xf32>
    %46 = tpu.reciprocal %45 {approx = true} : vector<8x1xf32> -> vector<8x1xf32>
    %47 = vector.broadcast %46 : vector<8x1xf32> to vector<8x8xf32>
    %48 = arith.mulf %43, %47 : vector<8x8xf32>
    %cst_21 = arith.constant dense<0.000000e+00> : vector<8x8xf32>
    %49 = tpu.matmul %48, %37, %cst_21 {dimension_numbers = #tpu.dot_dimension_numbers<[1], [0], [0], [1], [0, 0, 1, 1], [], []>} : vector<8x8xf32>, vector<8x8xf32>, vector<8x8xf32> -> vector<8x8xf32>
    %50 = vector.extract_strided_slice %10 {offsets = [0, 16], sizes = [8, 8], strides = [1, 1]} : vector<8x32xf32> to vector<8x8xf32>
    %51 = vector.extract_strided_slice %14 {offsets = [0, 16], sizes = [8, 8], strides = [1, 1]} : vector<8x32xf32> to vector<8x8xf32>
    %52 = vector.extract_strided_slice %19 {offsets = [0, 16], sizes = [8, 8], strides = [1, 1]} : vector<8x32xf32> to vector<8x8xf32>
    %cst_22 = arith.constant dense<0.000000e+00> : vector<8x8xf32>
    %53 = tpu.matmul %50, %51, %cst_22 {dimension_numbers = #tpu.dot_dimension_numbers<[1], [1], [0], [0], [0, 0, 1, 0], [], []>} : vector<8x8xf32>, vector<8x8xf32>, vector<8x8xf32> -> vector<8x8xf32>
    %cst_23 = arith.constant dense<0xFF800000> : vector<8xf32>
    %54 = vector.multi_reduction <maximumf>, %53, %cst_23 [1] : vector<8x8xf32> to vector<8xf32>
    %55 = vector.shape_cast %54 : vector<8xf32> to vector<8x1xf32>
    %56 = vector.broadcast %55 : vector<8x1xf32> to vector<8x8xf32>
    %57 = arith.subf %53, %56 : vector<8x8xf32>
    %58 = math.exp %57 : vector<8x8xf32>
    %cst_24 = arith.constant dense<0.000000e+00> : vector<8xf32>
    %59 = vector.multi_reduction <add>, %58, %cst_24 [1] : vector<8x8xf32> to vector<8xf32>
    %60 = vector.shape_cast %59 : vector<8xf32> to vector<8x1xf32>
    %61 = tpu.reciprocal %60 {approx = true} : vector<8x1xf32> -> vector<8x1xf32>
    %62 = vector.broadcast %61 : vector<8x1xf32> to vector<8x8xf32>
    %63 = arith.mulf %58, %62 : vector<8x8xf32>
    %cst_25 = arith.constant dense<0.000000e+00> : vector<8x8xf32>
    %64 = tpu.matmul %63, %52, %cst_25 {dimension_numbers = #tpu.dot_dimension_numbers<[1], [0], [0], [1], [0, 0, 1, 1], [], []>} : vector<8x8xf32>, vector<8x8xf32>, vector<8x8xf32> -> vector<8x8xf32>
    %65 = vector.extract_strided_slice %10 {offsets = [0, 24], sizes = [8, 8], strides = [1, 1]} : vector<8x32xf32> to vector<8x8xf32>
    %66 = vector.extract_strided_slice %14 {offsets = [0, 24], sizes = [8, 8], strides = [1, 1]} : vector<8x32xf32> to vector<8x8xf32>
    %67 = vector.extract_strided_slice %19 {offsets = [0, 24], sizes = [8, 8], strides = [1, 1]} : vector<8x32xf32> to vector<8x8xf32>
    %cst_26 = arith.constant dense<0.000000e+00> : vector<8x8xf32>
    %68 = tpu.matmul %65, %66, %cst_26 {dimension_numbers = #tpu.dot_dimension_numbers<[1], [1], [0], [0], [0, 0, 1, 0], [], []>} : vector<8x8xf32>, vector<8x8xf32>, vector<8x8xf32> -> vector<8x8xf32>
    %cst_27 = arith.constant dense<0xFF800000> : vector<8xf32>
    %69 = vector.multi_reduction <maximumf>, %68, %cst_27 [1] : vector<8x8xf32> to vector<8xf32>
    %70 = vector.shape_cast %69 : vector<8xf32> to vector<8x1xf32>
    %71 = vector.broadcast %70 : vector<8x1xf32> to vector<8x8xf32>
    %72 = arith.subf %68, %71 : vector<8x8xf32>
    %73 = math.exp %72 : vector<8x8xf32>
    %cst_28 = arith.constant dense<0.000000e+00> : vector<8xf32>
    %74 = vector.multi_reduction <add>, %73, %cst_28 [1] : vector<8x8xf32> to vector<8xf32>
    %75 = vector.shape_cast %74 : vector<8xf32> to vector<8x1xf32>
    %76 = tpu.reciprocal %75 {approx = true} : vector<8x1xf32> -> vector<8x1xf32>
    %77 = vector.broadcast %76 : vector<8x1xf32> to vector<8x8xf32>
    %78 = arith.mulf %73, %77 : vector<8x8xf32>
    %cst_29 = arith.constant dense<0.000000e+00> : vector<8x8xf32>
    %79 = tpu.matmul %78, %67, %cst_29 {dimension_numbers = #tpu.dot_dimension_numbers<[1], [0], [0], [1], [0, 0, 1, 1], [], []>} : vector<8x8xf32>, vector<8x8xf32>, vector<8x8xf32> -> vector<8x8xf32>
    %80 = tpu.concatenate %34, %49, %64, %79 in 1 : vector<8x8xf32>, vector<8x8xf32>, vector<8x8xf32>, vector<8x8xf32> -> vector<8x32xf32>
    %c0_30 = arith.constant 0 : index
    %c0_31 = arith.constant 0 : index
    %81 = vector.load %arg5[%c0_30, %c0_31] : memref<32x32xf32, #tpu.memory_space<vmem>>, vector<32x32xf32>
    %cst_32 = arith.constant dense<0.000000e+00> : vector<8x32xf32>
    %82 = tpu.matmul %80, %81, %cst_32 {dimension_numbers = #tpu.dot_dimension_numbers<[1], [0], [0], [1], [0, 0, 1, 1], [], []>} : vector<8x32xf32>, vector<32x32xf32>, vector<8x32xf32> -> vector<8x32xf32>
    %c3 = arith.constant 3 : index
    %c0_33 = arith.constant 0 : index
    %83 = vector.load %arg9[%c3, %c0_33] : memref<16x32xf32, #tpu.memory_space<vmem>>, vector<1x32xf32>
    %84 = vector.broadcast %83 : vector<1x32xf32> to vector<8x32xf32>
    %85 = arith.addf %82, %84 : vector<8x32xf32>
    %86 = arith.addf %1, %85 : vector<8x32xf32>
    %c4 = arith.constant 4 : index
    %c0_34 = arith.constant 0 : index
    %87 = vector.load %arg9[%c4, %c0_34] : memref<16x32xf32, #tpu.memory_space<vmem>>, vector<1x32xf32>
    %c5 = arith.constant 5 : index
    %c0_35 = arith.constant 0 : index
    %88 = vector.load %arg9[%c5, %c0_35] : memref<16x32xf32, #tpu.memory_space<vmem>>, vector<1x32xf32>
    %cst_36 = arith.constant dense<0.000000e+00> : vector<8xf32>
    %89 = vector.multi_reduction <add>, %86, %cst_36 [1] : vector<8x32xf32> to vector<8xf32>
    %90 = vector.shape_cast %89 : vector<8xf32> to vector<8x1xf32>
    %cst_37 = arith.constant 3.200000e+01 : f32
    %91 = vector.broadcast %cst_37 : f32 to vector<8x1xf32>
    %92 = arith.divf %90, %91 : vector<8x1xf32>
    %93 = vector.broadcast %92 : vector<8x1xf32> to vector<8x32xf32>
    %94 = arith.subf %86, %93 : vector<8x32xf32>
    %95 = arith.mulf %94, %94 : vector<8x32xf32>
    %cst_38 = arith.constant dense<0.000000e+00> : vector<8xf32>
    %96 = vector.multi_reduction <add>, %95, %cst_38 [1] : vector<8x32xf32> to vector<8xf32>
    %97 = vector.shape_cast %96 : vector<8xf32> to vector<8x1xf32>
    %cst_39 = arith.constant 3.200000e+01 : f32
    %98 = vector.broadcast %cst_39 : f32 to vector<8x1xf32>
    %99 = arith.divf %97, %98 : vector<8x1xf32>
    %cst_40 = arith.constant 9.99999974E-6 : f32
    %100 = vector.broadcast %cst_40 : f32 to vector<8x1xf32>
    %101 = arith.addf %99, %100 : vector<8x1xf32>
    %102 = math.rsqrt %101 : vector<8x1xf32>
    %103 = vector.broadcast %102 : vector<8x1xf32> to vector<8x32xf32>
    %104 = arith.mulf %94, %103 : vector<8x32xf32>
    %105 = vector.broadcast %87 : vector<1x32xf32> to vector<8x32xf32>
    %106 = arith.mulf %104, %105 : vector<8x32xf32>
    %107 = vector.broadcast %88 : vector<1x32xf32> to vector<8x32xf32>
    %108 = arith.addf %106, %107 : vector<8x32xf32>
    %c0_41 = arith.constant 0 : index
    %c0_42 = arith.constant 0 : index
    %109 = vector.load %arg6[%c0_41, %c0_42] : memref<32x64xf32, #tpu.memory_space<vmem>>, vector<32x64xf32>
    %cst_43 = arith.constant dense<0.000000e+00> : vector<8x64xf32>
    %110 = tpu.matmul %108, %109, %cst_43 {dimension_numbers = #tpu.dot_dimension_numbers<[1], [0], [0], [1], [0, 0, 1, 1], [], []>} : vector<8x32xf32>, vector<32x64xf32>, vector<8x64xf32> -> vector<8x64xf32>
    %c0_44 = arith.constant 0 : index
    %c0_45 = arith.constant 0 : index
    %111 = vector.load %arg7[%c0_44, %c0_45] : memref<1x64xf32, #tpu.memory_space<vmem>>, vector<1x64xf32>
    %112 = vector.broadcast %111 : vector<1x64xf32> to vector<8x64xf32>
    %113 = arith.addf %110, %112 : vector<8x64xf32>
    %cst_46 = arith.constant 0.000000e+00 : f32
    %114 = vector.broadcast %cst_46 : f32 to vector<8x64xf32>
    %115 = arith.maximumf %113, %114 : vector<8x64xf32>
    %c0_47 = arith.constant 0 : index
    %c0_48 = arith.constant 0 : index
    %116 = vector.load %arg8[%c0_47, %c0_48] : memref<64x32xf32, #tpu.memory_space<vmem>>, vector<64x32xf32>
    %cst_49 = arith.constant dense<0.000000e+00> : vector<8x32xf32>
    %117 = tpu.matmul %115, %116, %cst_49 {dimension_numbers = #tpu.dot_dimension_numbers<[1], [0], [0], [1], [0, 0, 1, 1], [], []>} : vector<8x64xf32>, vector<64x32xf32>, vector<8x32xf32> -> vector<8x32xf32>
    %c6 = arith.constant 6 : index
    %c0_50 = arith.constant 0 : index
    %118 = vector.load %arg9[%c6, %c0_50] : memref<16x32xf32, #tpu.memory_space<vmem>>, vector<1x32xf32>
    %119 = vector.broadcast %118 : vector<1x32xf32> to vector<8x32xf32>
    %120 = arith.addf %117, %119 : vector<8x32xf32>
    %121 = arith.addf %108, %120 : vector<8x32xf32>
    %c7 = arith.constant 7 : index
    %c0_51 = arith.constant 0 : index
    %122 = vector.load %arg9[%c7, %c0_51] : memref<16x32xf32, #tpu.memory_space<vmem>>, vector<1x32xf32>
    %c8 = arith.constant 8 : index
    %c0_52 = arith.constant 0 : index
    %123 = vector.load %arg9[%c8, %c0_52] : memref<16x32xf32, #tpu.memory_space<vmem>>, vector<1x32xf32>
    %cst_53 = arith.constant dense<0.000000e+00> : vector<8xf32>
    %124 = vector.multi_reduction <add>, %121, %cst_53 [1] : vector<8x32xf32> to vector<8xf32>
    %125 = vector.shape_cast %124 : vector<8xf32> to vector<8x1xf32>
    %cst_54 = arith.constant 3.200000e+01 : f32
    %126 = vector.broadcast %cst_54 : f32 to vector<8x1xf32>
    %127 = arith.divf %125, %126 : vector<8x1xf32>
    %128 = vector.broadcast %127 : vector<8x1xf32> to vector<8x32xf32>
    %129 = arith.subf %121, %128 : vector<8x32xf32>
    %130 = arith.mulf %129, %129 : vector<8x32xf32>
    %cst_55 = arith.constant dense<0.000000e+00> : vector<8xf32>
    %131 = vector.multi_reduction <add>, %130, %cst_55 [1] : vector<8x32xf32> to vector<8xf32>
    %132 = vector.shape_cast %131 : vector<8xf32> to vector<8x1xf32>
    %cst_56 = arith.constant 3.200000e+01 : f32
    %133 = vector.broadcast %cst_56 : f32 to vector<8x1xf32>
    %134 = arith.divf %132, %133 : vector<8x1xf32>
    %cst_57 = arith.constant 9.99999974E-6 : f32
    %135 = vector.broadcast %cst_57 : f32 to vector<8x1xf32>
    %136 = arith.addf %134, %135 : vector<8x1xf32>
    %137 = math.rsqrt %136 : vector<8x1xf32>
    %138 = vector.broadcast %137 : vector<8x1xf32> to vector<8x32xf32>
    %139 = arith.mulf %129, %138 : vector<8x32xf32>
    %140 = vector.broadcast %122 : vector<1x32xf32> to vector<8x32xf32>
    %141 = arith.mulf %139, %140 : vector<8x32xf32>
    %142 = vector.broadcast %123 : vector<1x32xf32> to vector<8x32xf32>
    %143 = arith.addf %141, %142 : vector<8x32xf32>
    %c0_58 = arith.constant 0 : index
    %c0_59 = arith.constant 0 : index
    %c0_60 = arith.constant 0 : index
    %144 = vector.load %arg10[%c0_58, %c0_59, %c0_60] : memref<1x8x32xf32, #tpu.memory_space<vmem>>, vector<1x8x32xf32>
    %145 = vector.shape_cast %144 : vector<1x8x32xf32> to vector<8x32xf32>
    %146 = vector.shape_cast %143 : vector<8x32xf32> to vector<1x8x32xf32>
    tpu.vector_store %arg10[%c0_58, %c0_59, %c0_60], %146 {strides = array<i32>} : memref<1x8x32xf32, #tpu.memory_space<vmem>>, vector<1x8x32xf32>,
    return
  }
  func.func @transform_0(%arg0: i32) -> (i32, i32, i32) {
    %c0_i32 = arith.constant 0 : i32
    %c0_i32_0 = arith.constant 0 : i32
    %c0_i32_1 = arith.constant 0 : i32
    return %arg0, %c0_i32, %c0_i32_0 : i32, i32, i32
  }
  func.func @transform_1(%arg0: i32) -> (i32, i32, i32) {
    %c0_i32 = arith.constant 0 : i32
    %c0_i32_0 = arith.constant 0 : i32
    %c0_i32_1 = arith.constant 0 : i32
    return %arg0, %c0_i32, %c0_i32_0 : i32, i32, i32
  }
  func.func @transform_2(%arg0: i32) -> (i32, i32) {
    %c0_i32 = arith.constant 0 : i32
    %c0_i32_0 = arith.constant 0 : i32
    %c0_i32_1 = arith.constant 0 : i32
    return %c0_i32, %c0_i32_0 : i32, i32
  }
  func.func @transform_3(%arg0: i32) -> (i32, i32) {
    %c0_i32 = arith.constant 0 : i32
    %c0_i32_0 = arith.constant 0 : i32
    %c0_i32_1 = arith.constant 0 : i32
    return %c0_i32, %c0_i32_0 : i32, i32
  }
  func.func @transform_4(%arg0: i32) -> (i32, i32) {
    %c0_i32 = arith.constant 0 : i32
    %c0_i32_0 = arith.constant 0 : i32
    %c0_i32_1 = arith.constant 0 : i32
    return %c0_i32, %c0_i32_0 : i32, i32
  }
  func.func @transform_5(%arg0: i32) -> (i32, i32) {
    %c0_i32 = arith.constant 0 : i32
    %c0_i32_0 = arith.constant 0 : i32
    %c0_i32_1 = arith.constant 0 : i32
    return %c0_i32, %c0_i32_0 : i32, i32
  }
  func.func @transform_6(%arg0: i32) -> (i32, i32) {
    %c0_i32 = arith.constant 0 : i32
    %c0_i32_0 = arith.constant 0 : i32
    %c0_i32_1 = arith.constant 0 : i32
    return %c0_i32, %c0_i32_0 : i32, i32
  }
  func.func @transform_7(%arg0: i32) -> (i32, i32) {
    %c0_i32 = arith.constant 0 : i32
    %c0_i32_0 = arith.constant 0 : i32
    %c0_i32_1 = arith.constant 0 : i32
    return %c0_i32, %c0_i32_0 : i32, i32
  }
  func.func @transform_8(%arg0: i32) -> (i32, i32) {
    %c0_i32 = arith.constant 0 : i32
    %c0_i32_0 = arith.constant 0 : i32
    %c0_i32_1 = arith.constant 0 : i32
    return %c0_i32, %c0_i32_0 : i32, i32
  }
  func.func @transform_9(%arg0: i32) -> (i32, i32, i32) {
    %c0_i32 = arith.constant 0 : i32
    %c0_i32_0 = arith.constant 0 : i32
    %c0_i32_1 = arith.constant 0 : i32
    return %arg0, %c0_i32, %c0_i32_0 : i32, i32, i32
  }
}

</mosaic_0001>

<llo_original>
// kernel: tpu_custom_call.1
$region0: #{tpu_custom_call.1}
  #allocation0 [shape = 'u32[]', space=smem, size = 0x4, offset = 0x4, fixed_abs, tag = 'smem constant byte address 0x4 - core index']
  #allocation1 [shape = 'u32[144,128]{1,0:T(1,128)}', space=vmem, size = 0x12000, scoped, tag = 'internal scratch']
  %s0 = inlined_call_operand.hbm [shape: f32[2,8,32], index: 0, kind: input, shape index: {}]
  %s1 = inlined_call_operand.hbm [shape: f32[2,8,32], index: 1, kind: input, shape index: {}]
  %s2 = inlined_call_operand.vmem [shape: f32[32,64], index: 2, kind: input, shape index: {}]
  %s3 = inlined_call_operand.vmem [shape: f32[32,32], index: 3, kind: input, shape index: {}]
  %s4 = inlined_call_operand.vmem [shape: f32[32,32], index: 4, kind: input, shape index: {}]
  %s5 = inlined_call_operand.hbm [shape: f32[32,64], index: 5, kind: input, shape index: {}]
  %s6 = inlined_call_operand.vmem [shape: f32[1,64], index: 6, kind: input, shape index: {}]
  %s7 = inlined_call_operand.vmem [shape: f32[64,32], index: 7, kind: input, shape index: {}]
  %s8 = inlined_call_operand.hbm [shape: f32[16,32], index: 8, kind: input, shape index: {}]
  %s9 = inlined_call_operand.hbm [shape: f32[2,8,32], index: 9, kind: output, shape index: {}]
  %s10 = sld [smem:[#allocation0]]
  $region85: #{tpu_custom_call.1} parent=0
    _
  %s12 = ssub.s32 1, %s10
  %s13 = scalar_select 0, %s12, %s10
  $region1: #{tpu_custom_call.1} parent=0
    #allocation2 [shape = 'u8[8192]{0}', space=vmem, size = 0x2000, scoped, tag = 'input window, operand 0']
    #allocation3 [shape = 's32[2]{0}', space=sflag, size = 0x8, scoped, tag = 'scoped memory for tpu_custom_call.1']
    #allocation4 [shape = 's32[2]{0}', space=sflag, size = 0x8, scoped, tag = 'scoped memory for tpu_custom_call.1']
    #allocation5 [shape = 'u8[8192]{0}', space=vmem, size = 0x2000, scoped, tag = 'input window, operand 1']
    #allocation6 [shape = 's32[2]{0}', space=sflag, size = 0x8, scoped, tag = 'scoped memory for tpu_custom_call.1']
    #allocation7 [shape = 'u8[16384]{0}', space=vmem, size = 0x4000, scoped, tag = 'input window, operand 5, single buffered']
    #allocation8 [shape = 'u8[8192]{0}', space=vmem, size = 0x2000, scoped, tag = 'input window, operand 8, single buffered']
    #allocation9 [shape = 's32[1]{0}', space=sflag, size = 0x4, scoped, tag = 'scoped memory for tpu_custom_call.1']
    #allocation10 [shape = 'u8[8192]{0}', space=vmem, size = 0x2000, scoped, tag = 'output window, operand 0']
    %14 = vsyncpa [#allocation3], 0
    %s15 = scalar_lea.sflag [#allocation3], 1
    %16 = vsyncpa %s15, 0
    %17 = vsyncpa [#allocation6], 0
    %s18 = scalar_lea.sflag [#allocation6], 1
    %19 = vsyncpa %s18, 0
    %20 = vsyncpa [#allocation9], 0
    %21 = vsyncpa [#allocation4], 0
    %s22 = scalar_lea.sflag [#allocation4], 1
    %23 = vsyncpa %s22, 0
    loop: start=0, step=1, limit=4
    $region2: #{tpu_custom_call.1} parent=1 // loop_pre_header
      _
    $region3: #{tpu_custom_call.1} parent=1 // loop_header
      %s25 = sphi 0, %s29
      %p26 = scmp.ge.s32.totalorder %s25, 4
      %s35 = sphi 0, %s37
      %s38 = sphi 0, %s35
      %s39 = sphi 0, %s38
      %s55 = sphi 0, %s39
      %s61 = sphi 0, %s63
      %s64 = sphi 0, %s61
      %s65 = sphi 0, %s64
      %s81 = sphi 0, %s65
      %s85 = sphi 0, %s85
      %s87 = sphi 0, %s85
      %s88 = sphi 0, %s87
      %s102 = sphi 0, %s88
      %s106 = sphi 0, %s106
      %s108 = sphi 0, %s106
      %s109 = sphi 0, %s108
      %s123 = sphi 0, %s109
      %s127 = sphi 0, %s127
      %s129 = sphi 0, %s127
      %s130 = sphi 0, %s129
      %s144 = sphi 0, %s130
      %s148 = sphi 0, %s148
      %s150 = sphi 0, %s148
      %s151 = sphi 0, %s150
      %s165 = sphi 0, %s151
      %s169 = sphi 0, %s169
      %s171 = sphi 0, %s169
      %s172 = sphi 0, %s171
      %s186 = sphi 0, %s172
      %s190 = sphi 0, %s190
      %s192 = sphi 0, %s190
      %s193 = sphi 0, %s192
      %s207 = sphi 0, %s193
      %s211 = sphi 0, %s211
      %s213 = sphi 0, %s211
      %s214 = sphi 0, %s213
      %s228 = sphi 0, %s214
      %s234 = sphi 0, %s236
      %s237 = sphi 0, %s234
      %s238 = sphi 0, %s237
      %s254 = sphi 0, %s238
    $region4: #{tpu_custom_call.1} parent=1 // loop_header_branch
      %28 = sbr.rel (%p26) target = $region8
    $region5: #{tpu_custom_call.1} parent=1 // loop_body
      %s30 = ssub.s32 %s25, 1
      %s31 = ssub.s32 %s25, 2
      %s32 = sadd.s32 %s25, 1
      %s33 = ssub.s32 %s25, %s32
      %p34 = scmp.eq.s32.totalorder %s33, 0
      %s36 = sadd.s32 %s35, 1
      %s37 = scalar_select %p34, %s35, %s36
      %p40 = pneg %p34
      %p41 = scmp.eq.s32.totalorder %s25, 1
      %p42 = por %p40, %p41
      %p43 = scmp.ne.s32.totalorder %s35, %s38
      %p44 = scmp.eq.s32.totalorder %s25, 0
      %p45 = por %p43, %p44
      %p46 = scmp.ne.s32.totalorder %s35, %s38
      %p47 = scmp.eq.s32.totalorder %s30, 1
      %p48 = por %p46, %p47
      %p49 = scmp.ne.s32.totalorder %s38, %s39
      %p50 = scmp.eq.s32.totalorder %s30, 0
      %p51 = por %p49, %p50
      %p52 = scmp.ne.s32.totalorder %s38, %s39
      %p53 = scmp.eq.s32.totalorder %s31, 1
      %p54 = por %p52, %p53
      %p56 = scmp.ne.s32.totalorder %s39, %s55
      %p57 = scmp.eq.s32.totalorder %s31, 0
      %p58 = por %p56, %p57
      %s59 = ssub.s32 %s25, %s32
      %p60 = scmp.eq.s32.totalorder %s59, 0
      %s62 = sadd.s32 %s61, 1
      %s63 = scalar_select %p60, %s61, %s62
      %p66 = pneg %p60
      %p67 = scmp.eq.s32.totalorder %s25, 1
      %p68 = por %p66, %p67
      %p69 = scmp.ne.s32.totalorder %s61, %s64
      %p70 = scmp.eq.s32.totalorder %s25, 0
      %p71 = por %p69, %p70
      %p72 = scmp.ne.s32.totalorder %s61, %s64
      %p73 = scmp.eq.s32.totalorder %s30, 1
      %p74 = por %p72, %p73
      %p75 = scmp.ne.s32.totalorder %s64, %s65
      %p76 = scmp.eq.s32.totalorder %s30, 0
      %p77 = por %p75, %p76
      %p78 = scmp.ne.s32.totalorder %s64, %s65
      %p79 = scmp.eq.s32.totalorder %s31, 1
      %p80 = por %p78, %p79
      %p82 = scmp.ne.s32.totalorder %s65, %s81
      %p83 = scmp.eq.s32.totalorder %s31, 0
      %p84 = por %p82, %p83
      %s86 = sadd.s32 %s85, 1
      %p89 = scmp.eq.s32.totalorder %s25, 1
      %p90 = scmp.ne.s32.totalorder %s85, %s87
      %p91 = scmp.eq.s32.totalorder %s25, 0
      %p92 = por %p90, %p91
      %p93 = scmp.ne.s32.totalorder %s85, %s87
      %p94 = scmp.eq.s32.totalorder %s30, 1
      %p95 = por %p93, %p94
      %p96 = scmp.ne.s32.totalorder %s87, %s88
      %p97 = scmp.eq.s32.totalorder %s30, 0
      %p98 = por %p96, %p97
      %p99 = scmp.ne.s32.totalorder %s87, %s88
      %p100 = scmp.eq.s32.totalorder %s31, 1
      %p101 = por %p99, %p100
      %p103 = scmp.ne.s32.totalorder %s88, %s102
      %p104 = scmp.eq.s32.totalorder %s31, 0
      %p105 = por %p103, %p104
      %s107 = sadd.s32 %s106, 1
      %p110 = scmp.eq.s32.totalorder %s25, 1
      %p111 = scmp.ne.s32.totalorder %s106, %s108
      %p112 = scmp.eq.s32.totalorder %s25, 0
      %p113 = por %p111, %p112
      %p114 = scmp.ne.s32.totalorder %s106, %s108
      %p115 = scmp.eq.s32.totalorder %s30, 1
      %p116 = por %p114, %p115
      %p117 = scmp.ne.s32.totalorder %s108, %s109
      %p118 = scmp.eq.s32.totalorder %s30, 0
      %p119 = por %p117, %p118
      %p120 = scmp.ne.s32.totalorder %s108, %s109
      %p121 = scmp.eq.s32.totalorder %s31, 1
      %p122 = por %p120, %p121
      %p124 = scmp.ne.s32.totalorder %s109, %s123
      %p125 = scmp.eq.s32.totalorder %s31, 0
      %p126 = por %p124, %p125
      %s128 = sadd.s32 %s127, 1
      %p131 = scmp.eq.s32.totalorder %s25, 1
      %p132 = scmp.ne.s32.totalorder %s127, %s129
      %p133 = scmp.eq.s32.totalorder %s25, 0
      %p134 = por %p132, %p133
      %p135 = scmp.ne.s32.totalorder %s127, %s129
      %p136 = scmp.eq.s32.totalorder %s30, 1
      %p137 = por %p135, %p136
      %p138 = scmp.ne.s32.totalorder %s129, %s130
      %p139 = scmp.eq.s32.totalorder %s30, 0
      %p140 = por %p138, %p139
      %p141 = scmp.ne.s32.totalorder %s129, %s130
      %p142 = scmp.eq.s32.totalorder %s31, 1
      %p143 = por %p141, %p142
      %p145 = scmp.ne.s32.totalorder %s130, %s144
      %p146 = scmp.eq.s32.totalorder %s31, 0
      %p147 = por %p145, %p146
      %s149 = sadd.s32 %s148, 1
      %p152 = scmp.eq.s32.totalorder %s25, 1
      %p153 = scmp.ne.s32.totalorder %s148, %s150
      %p154 = scmp.eq.s32.totalorder %s25, 0
      %p155 = por %p153, %p154
      %p156 = scmp.ne.s32.totalorder %s148, %s150
      %p157 = scmp.eq.s32.totalorder %s30, 1
      %p158 = por %p156, %p157
      %p159 = scmp.ne.s32.totalorder %s150, %s151
      %p160 = scmp.eq.s32.totalorder %s30, 0
      %p161 = por %p159, %p160
      %p162 = scmp.ne.s32.totalorder %s150, %s151
      %p163 = scmp.eq.s32.totalorder %s31, 1
      %p164 = por %p162, %p163
      %p166 = scmp.ne.s32.totalorder %s151, %s165
      %p167 = scmp.eq.s32.totalorder %s31, 0
      %p168 = por %p166, %p167
      %s170 = sadd.s32 %s169, 1
      %p173 = scmp.eq.s32.totalorder %s25, 1
      %p174 = scmp.ne.s32.totalorder %s169, %s171
      %p175 = scmp.eq.s32.totalorder %s25, 0
      %p176 = por %p174, %p175
      %p177 = scmp.ne.s32.totalorder %s169, %s171
      %p178 = scmp.eq.s32.totalorder %s30, 1
      %p179 = por %p177, %p178
      %p180 = scmp.ne.s32.totalorder %s171, %s172
      %p181 = scmp.eq.s32.totalorder %s30, 0
      %p182 = por %p180, %p181
      %p183 = scmp.ne.s32.totalorder %s171, %s172
      %p184 = scmp.eq.s32.totalorder %s31, 1
      %p185 = por %p183, %p184
      %p187 = scmp.ne.s32.totalorder %s172, %s186
      %p188 = scmp.eq.s32.totalorder %s31, 0
      %p189 = por %p187, %p188
      %s191 = sadd.s32 %s190, 1
      %p194 = scmp.eq.s32.totalorder %s25, 1
      %p195 = scmp.ne.s32.totalorder %s190, %s192
      %p196 = scmp.eq.s32.totalorder %s25, 0
      %p197 = por %p195, %p196
      %p198 = scmp.ne.s32.totalorder %s190, %s192
      %p199 = scmp.eq.s32.totalorder %s30, 1
      %p200 = por %p198, %p199
      %p201 = scmp.ne.s32.totalorder %s192, %s193
      %p202 = scmp.eq.s32.totalorder %s30, 0
      %p203 = por %p201, %p202
      %p204 = scmp.ne.s32.totalorder %s192, %s193
      %p205 = scmp.eq.s32.totalorder %s31, 1
      %p206 = por %p204, %p205
      %p208 = scmp.ne.s32.totalorder %s193, %s207
      %p209 = scmp.eq.s32.totalorder %s31, 0
      %p210 = por %p208, %p209
      %s212 = sadd.s32 %s211, 1
      %p215 = scmp.eq.s32.totalorder %s25, 1
      %p216 = scmp.ne.s32.totalorder %s211, %s213
      %p217 = scmp.eq.s32.totalorder %s25, 0
      %p218 = por %p216, %p217
      %p219 = scmp.ne.s32.totalorder %s211, %s213
      %p220 = scmp.eq.s32.totalorder %s30, 1
      %p221 = por %p219, %p220
      %p222 = scmp.ne.s32.totalorder %s213, %s214
      %p223 = scmp.eq.s32.totalorder %s30, 0
      %p224 = por %p222, %p223
      %p225 = scmp.ne.s32.totalorder %s213, %s214
      %p226 = scmp.eq.s32.totalorder %s31, 1
      %p227 = por %p225, %p226
      %p229 = scmp.ne.s32.totalorder %s214, %s228
      %p230 = scmp.eq.s32.totalorder %s31, 0
      %p231 = por %p229, %p230
      %s232 = ssub.s32 %s25, %s32
      %p233 = scmp.eq.s32.totalorder %s232, 0
      %s235 = sadd.s32 %s234, 1
      %s236 = scalar_select %p233, %s234, %s235
      %p239 = pneg %p233
      %p240 = scmp.eq.s32.totalorder %s25, 1
      %p241 = por %p239, %p240
      %p242 = scmp.ne.s32.totalorder %s234, %s237
      %p243 = scmp.eq.s32.totalorder %s25, 0
      %p244 = por %p242, %p243
      %p245 = scmp.ne.s32.totalorder %s234, %s237
      %p246 = scmp.eq.s32.totalorder %s30, 1
      %p247 = por %p245, %p246
      %p248 = scmp.ne.s32.totalorder %s237, %s238
      %p249 = scmp.eq.s32.totalorder %s30, 0
      %p250 = por %p248, %p249
      %p251 = scmp.ne.s32.totalorder %s237, %s238
      %p252 = scmp.eq.s32.totalorder %s31, 1
      %p253 = por %p251, %p252
      %p255 = scmp.ne.s32.totalorder %s238, %s254
      %p256 = scmp.eq.s32.totalorder %s31, 0
      %p257 = por %p255, %p256
      %p258 = scmp.le.s32.totalorder 1, %s25
      %p259 = scmp.lt.s32.totalorder %s25, 3
      %p260 = pnand %p258, %p259
      %p261 = pneg %p260
      // Predicated region
      $region9: #{tpu_custom_call.1} parent=5 // pred_check
        _
      $region10: #{tpu_custom_call.1} parent=5 // pred_check_branch
        %263 = sbr.rel (%p260) target = $region12
      $region11: #{tpu_custom_call.1} parent=5 // pred_region
        %s264 = ssub.s32 %s25, 1
        // Predicated region
        $region13: #{tpu_custom_call.1} parent=11 // pred_check
          %p265 = pneg %p98
        $region14: #{tpu_custom_call.1} parent=11 // pred_check_branch
          %267 = sbr.rel (%p265) target = $region16
        $region15: #{tpu_custom_call.1} parent=11 // pred_region
          _
        $region16: #{tpu_custom_call.1} parent=11 // pred_fallthru
          _
        // Predicated region
        $region17: #{tpu_custom_call.1} parent=11 // pred_check
          %p268 = pneg %p119
        $region18: #{tpu_custom_call.1} parent=11 // pred_check_branch
          %270 = sbr.rel (%p268) target = $region20
        $region19: #{tpu_custom_call.1} parent=11 // pred_region
          _
        $region20: #{tpu_custom_call.1} parent=11 // pred_fallthru
          _
        // Predicated region
        $region21: #{tpu_custom_call.1} parent=11 // pred_check
          %p271 = pneg %p140
        $region22: #{tpu_custom_call.1} parent=11 // pred_check_branch
          %273 = sbr.rel (%p271) target = $region24
        $region23: #{tpu_custom_call.1} parent=11 // pred_region
          _
        $region24: #{tpu_custom_call.1} parent=11 // pred_fallthru
          _
        // Predicated region
        $region25: #{tpu_custom_call.1} parent=11 // pred_check
          %p274 = pneg %p161
        $region26: #{tpu_custom_call.1} parent=11 // pred_check_branch
          %276 = sbr.rel (%p274) target = $region28
        $region27: #{tpu_custom_call.1} parent=11 // pred_region
          %s278 = ssub.s32 512, 512
          %279 = vsyncadd [#allocation6], %s278
          %s280 = sshll.u32 [#allocation7], 4
          %s281 = int_to_ptr.vmem [resolvable:$true] %s280
          %286 = dma.hbm_to_vmem [thread:$0]  %s5, 512, %s281, [#allocation6], 128, 128, 8
        $region28: #{tpu_custom_call.1} parent=11 // pred_fallthru
          _
        // Predicated region
        $region29: #{tpu_custom_call.1} parent=11 // pred_check
          %p287 = pneg %p182
        $region30: #{tpu_custom_call.1} parent=11 // pred_check_branch
          %289 = sbr.rel (%p287) target = $region32
        $region31: #{tpu_custom_call.1} parent=11 // pred_region
          _
        $region32: #{tpu_custom_call.1} parent=11 // pred_fallthru
          _
        // Predicated region
        $region33: #{tpu_custom_call.1} parent=11 // pred_check
          %p290 = pneg %p203
        $region34: #{tpu_custom_call.1} parent=11 // pred_check_branch
          %292 = sbr.rel (%p290) target = $region36
        $region35: #{tpu_custom_call.1} parent=11 // pred_region
          _
        $region36: #{tpu_custom_call.1} parent=11 // pred_fallthru
          _
        // Predicated region
        $region37: #{tpu_custom_call.1} parent=11 // pred_check
          %p293 = pneg %p224
        $region38: #{tpu_custom_call.1} parent=11 // pred_check_branch
          %295 = sbr.rel (%p293) target = $region40
        $region39: #{tpu_custom_call.1} parent=11 // pred_region
          %s297 = ssub.s32 256, 256
          %298 = vsyncadd [#allocation9], %s297
          %s299 = sshll.u32 [#allocation8], 4
          %s300 = int_to_ptr.vmem [resolvable:$true] %s299
          %305 = dma.hbm_to_vmem [thread:$0]  %s8, 256, %s300, [#allocation9], 128, 128, 8
        $region40: #{tpu_custom_call.1} parent=11 // pred_fallthru
          _
      $region12: #{tpu_custom_call.1} parent=5 // pred_fallthru
        _
      %p306 = scmp.lt.s32.totalorder %s25, 2
      // Predicated region
      $region41: #{tpu_custom_call.1} parent=5 // pred_check
        %p307 = pneg %p306
      $region42: #{tpu_custom_call.1} parent=5 // pred_check_branch
        %309 = sbr.rel (%p307) target = $region44
      $region43: #{tpu_custom_call.1} parent=5 // pred_region
        // Predicated region
        $region45: #{tpu_custom_call.1} parent=43 // pred_check
          %p310 = pneg %p45
        $region46: #{tpu_custom_call.1} parent=43 // pred_check_branch
          %312 = sbr.rel (%p310) target = $region48
        $region47: #{tpu_custom_call.1} parent=43 // pred_region
          %s313 = sand.u32 %s35, 1
          %s314 = scalar_lea.sflag [#allocation3], %s313
          %s315 = sand.u32 %s35, 1
          %s316 = smul.addr %s315, 8
          %s317 = scalar_lea.vmem [#allocation2], %s316
          %s319 = ssub.s32 128, 128
          %320 = vsyncadd %s314, %s319
          %s321 = smul.addr %s25, 128
          %s322 = scalar_lea.hbm %s0, %s321
          %s324 = sshll.u32 %s317, 4
          %s325 = int_to_ptr.vmem [resolvable:$true] %s324
          %327 = dma.hbm_to_vmem [thread:$0]  %s322, 128, %s325, %s314
        $region48: #{tpu_custom_call.1} parent=43 // pred_fallthru
          _
        // Predicated region
        $region49: #{tpu_custom_call.1} parent=43 // pred_check
          %p328 = pneg %p71
        $region50: #{tpu_custom_call.1} parent=43 // pred_check_branch
          %330 = sbr.rel (%p328) target = $region52
        $region51: #{tpu_custom_call.1} parent=43 // pred_region
          %s331 = sand.u32 %s25, 1
          %s332 = scalar_lea.sflag [#allocation6], %s331
          %s333 = sand.u32 %s61, 1
          %s334 = smul.addr %s333, 8
          %s335 = scalar_lea.vmem [#allocation5], %s334
          %s337 = ssub.s32 128, 128
          %338 = vsyncadd %s332, %s337
          %s339 = smul.addr %s25, 128
          %s340 = scalar_lea.hbm %s1, %s339
          %s342 = sshll.u32 %s335, 4
          %s343 = int_to_ptr.vmem [resolvable:$true] %s342
          %345 = dma.hbm_to_vmem [thread:$0]  %s340, 128, %s343, %s332
        $region52: #{tpu_custom_call.1} parent=43 // pred_fallthru
          _
      $region44: #{tpu_custom_call.1} parent=5 // pred_fallthru
        _
      %p346 = scmp.le.s32.totalorder 1, %s25
      %p347 = scmp.lt.s32.totalorder %s25, 3
      %p348 = pnand %p346, %p347
      %p349 = pneg %p348
      // Predicated region
      $region53: #{tpu_custom_call.1} parent=5 // pred_check
        _
      $region54: #{tpu_custom_call.1} parent=5 // pred_check_branch
        %351 = sbr.rel (%p348) target = $region56
      $region55: #{tpu_custom_call.1} parent=5 // pred_region
        %s352 = ssub.s32 %s25, 1
        %s353 = sand.u32 %s38, 1
        %s354 = scalar_lea.sflag [#allocation3], %s353
        %s355 = sand.u32 %s38, 1
        %s356 = smul.addr %s355, 8
        %s357 = scalar_lea.vmem [#allocation2], %s356
        // Predicated region
        $region57: #{tpu_custom_call.1} parent=55 // pred_check
          %p358 = pneg %p51
        $region58: #{tpu_custom_call.1} parent=55 // pred_check_branch
          %360 = sbr.rel (%p358) target = $region60
        $region59: #{tpu_custom_call.1} parent=55 // pred_region
          %361 = dma.done %s354, 128
        $region60: #{tpu_custom_call.1} parent=55 // pred_fallthru
          _
        %s362 = sand.u32 %s30, 1
        %s363 = scalar_lea.sflag [#allocation6], %s362
        %s364 = sand.u32 %s64, 1
        %s365 = smul.addr %s364, 8
        %s366 = scalar_lea.vmem [#allocation5], %s365
        // Predicated region
        $region61: #{tpu_custom_call.1} parent=55 // pred_check
          %p367 = pneg %p77
        $region62: #{tpu_custom_call.1} parent=55 // pred_check_branch
          %369 = sbr.rel (%p367) target = $region64
        $region63: #{tpu_custom_call.1} parent=55 // pred_region
          %370 = dma.done %s363, 128
        $region64: #{tpu_custom_call.1} parent=55 // pred_fallthru
          _
        // Predicated region
        $region65: #{tpu_custom_call.1} parent=55 // pred_check
          %p371 = pneg %p161
        $region66: #{tpu_custom_call.1} parent=55 // pred_check_branch
          %373 = sbr.rel (%p371) target = $region68
        $region67: #{tpu_custom_call.1} parent=55 // pred_region
          %374 = dma.done [#allocation6], 512
        $region68: #{tpu_custom_call.1} parent=55 // pred_fallthru
          _
        // Predicated region
        $region69: #{tpu_custom_call.1} parent=55 // pred_check
          %p375 = pneg %p224
        $region70: #{tpu_custom_call.1} parent=55 // pred_check_branch
          %377 = sbr.rel (%p375) target = $region72
        $region71: #{tpu_custom_call.1} parent=55 // pred_region
          %378 = dma.done [#allocation9], 256
        $region72: #{tpu_custom_call.1} parent=55 // pred_fallthru
          _
        %s379 = sand.u32 %s38, 1
        %s380 = scalar_lea.sflag [#allocation3], %s379
        %s381 = sand.u32 %s38, 1
        %s382 = smul.addr %s381, 8
        %s383 = scalar_lea.vmem [#allocation2], %s382
        %p384 = pneg %p51
        %p385 = pneg %p48
        %s386 = sand.u32 %s30, 1
        %s387 = scalar_lea.sflag [#allocation6], %s386
        %s388 = sand.u32 %s64, 1
        %s389 = smul.addr %s388, 8
        %s390 = scalar_lea.vmem [#allocation5], %s389
        %p391 = pneg %p77
        %p392 = pneg %p74
        %p393 = pneg %p98
        %p394 = pneg %p95
        %p395 = pneg %p119
        %p396 = pneg %p116
        %p397 = pneg %p140
        %p398 = pneg %p137
        %p399 = pneg %p161
        %p400 = pneg %p158
        %p401 = pneg %p182
        %p402 = pneg %p179
        %p403 = pneg %p203
        %p404 = pneg %p200
        %p405 = pneg %p224
        %p406 = pneg %p221
        %p407 = pneg %p250
        %p408 = pneg %p247
        %s409 = sand.u32 %s237, 1
        %s410 = scalar_lea.sflag [#allocation4], %s409
        %s411 = sand.u32 %s237, 1
        %s412 = smul.addr %s411, 8
        %s413 = scalar_lea.vmem [#allocation10], %s412
        %v414 = vld [vmem:[%s357] sm:$0xff]
        %v415 = vld [vmem:[%s366] sm:$0xff]
        %v416 = vadd.f32 %v414, %v415
        %v417 = vld [vmem:[%s2] sm:$0xff]
        %v418 = vld [vmem:[%s2 + $0x8] sm:$0xff]
        %v419 = vld [vmem:[%s2 + $0x10] sm:$0xff]
        %v420 = vld [vmem:[%s2 + $0x18] sm:$0xff]
        %vm421 = vcmask 261120
        %v423 = vsel %vm421, %v416, 0
        %425 = vmatprep.subr.mxu0 0.0
        %426 = vmatpush1.msra.mxu0 0.0
        %427 = vmatprep.subr.mxu0 0.0
        %428 = vmatpush1.msra.mxu0 0.0
        %429 = vmatprep.subr.mxu0 0.0
        %430 = vmatpush1.msra.mxu0 0.0
        %431 = vmatprep.subr.mxu0 0.0
        %432 = vmatpush1.msra.mxu0 0.0
        %433 = vmatprep.subr.mxu0 0.0
        %434 = vmatpush1.msra.mxu0 0.0
        %435 = vmatprep.subr.mxu0 0.0
        %436 = vmatpush1.msra.mxu0 0.0
        %437 = vmatprep.subr.mxu0 0.0
        %438 = vmatpush1.msra.mxu0 0.0
        %439 = vmatprep.subr.mxu0 0.0
        %440 = vmatpush1.msra.mxu0 0.0
        %441 = vmatprep.subr.mxu0 0.0
        %442 = vmatpush1.msra.mxu0 0.0
        %443 = vmatprep.subr.mxu0 0.0
        %444 = vmatpush1.msra.mxu0 0.0
        %445 = vmatprep.subr.mxu0 0.0
        %446 = vmatpush1.msra.mxu0 0.0
        %447 = vmatprep.subr.mxu0 0.0
        %448 = vmatpush1.msra.mxu0 0.0
        %449 = vmatprep.subr.mxu0 0.0
        %450 = vmatpush1.msra.mxu0 %v420
        %451 = vmatprep.subr.mxu0 0.0
        %452 = vmatpush1.msra.mxu0 %v419
        %453 = vmatprep.subr.mxu0 0.0
        %454 = vmatpush1.msra.mxu0 %v418
        %455 = vmatprep.subr.mxu0 0.0
        %456 = vmatpush1.msra.mxu0 %v417
        %457 = vmatprep.subr.mxu0 0.0
        %458 = vmatpush2.msra.mxu0 0.0
        %459 = vmatprep.subr.mxu0 0.0
        %460 = vmatpush2.msra.mxu0 0.0
        %461 = vmatprep.subr.mxu0 0.0
        %462 = vmatpush2.msra.mxu0 0.0
        %463 = vmatprep.subr.mxu0 0.0
        %464 = vmatpush2.msra.mxu0 0.0
        %465 = vmatprep.subr.mxu0 0.0
        %466 = vmatpush2.msra.mxu0 0.0
        %467 = vmatprep.subr.mxu0 0.0
        %468 = vmatpush2.msra.mxu0 0.0
        %469 = vmatprep.subr.mxu0 0.0
        %470 = vmatpush2.msra.mxu0 0.0
        %471 = vmatprep.subr.mxu0 0.0
        %472 = vmatpush2.msra.mxu0 0.0
        %473 = vmatprep.subr.mxu0 0.0
        %474 = vmatpush2.msra.mxu0 0.0
        %475 = vmatprep.subr.mxu0 0.0
        %476 = vmatpush2.msra.mxu0 0.0
        %477 = vmatprep.subr.mxu0 0.0
        %478 = vmatpush2.msra.mxu0 0.0
        %479 = vmatprep.subr.mxu0 0.0
        %480 = vmatpush2.msra.mxu0 0.0
        %481 = vmatprep.subr.mxu0 0.0
        %482 = vmatpush2.msra.mxu0 0.0
        %483 = vmatprep.subr.mxu0 0.0
        %484 = vmatpush2.msra.mxu0 0.0
        %485 = vmatprep.subr.mxu0 0.0
        %486 = vmatpush2.msra.mxu0 0.0
        %487 = vmatprep.subr.mxu0 0.0
        %488 = vmatpush2.msra.mxu0 0.0
        %489 = vmatprep.mubr.f32.mxu0 0.0
        %490 = vmatmul.mubr.f32.gmra.mxu0 %v423
        %v491 = vpop.f32.mrf.mxu0
        %v492 = vadd.f32 0.0, %v491
        %v493 = vpop.f32.mrf.mxu0
        %494 = vdwg.mxu0
        %v495 = vld [vmem:[#allocation8] sm:$0x1]
        %v496 = vlaneseq
        %v497 = vshrl.u32 %v496, 7
        %v498 = vsub.s32 0, %v497
        %v499 = vrot.slane %v495, %v498
        %v500 = vadd.f32 %v492, %v499
        %v501 = vld [vmem:[#allocation8 + $0x1] sm:$0x1]
        %v502 = vlaneseq
        %v503 = vshrl.u32 %v502, 7
        %v504 = vsub.s32 0, %v503
        %v505 = vrot.slane %v501, %v504
        %507 = vrot.lane.b32.xlu0 %v505, 32
        %v508 = vpop.permute.xlu0 %507
        %v510 = vadd.f32 %v492, %v508
        %v511 = vld [vmem:[%s3] sm:$0xff]
        %v512 = vld [vmem:[%s3 + $0x8] sm:$0xff]
        %v513 = vld [vmem:[%s3 + $0x10] sm:$0xff]
        %v514 = vld [vmem:[%s3 + $0x18] sm:$0xff]
        %v515 = vld [vmem:[#allocation8 + $0x2] sm:$0x1]
        %v516 = vlaneseq
        %v517 = vshrl.u32 %v516, 7
        %v518 = vsub.s32 0, %v517
        %v519 = vrot.slane %v515, %v518
        %v521 = vsel %vm421, %v414, 0
        %523 = vmatprep.subr.mxu0 0.0
        %524 = vmatpush1.msra.mxu0 0.0
        %525 = vmatprep.subr.mxu0 0.0
        %526 = vmatpush1.msra.mxu0 0.0
        %527 = vmatprep.subr.mxu0 0.0
        %528 = vmatpush1.msra.mxu0 0.0
        %529 = vmatprep.subr.mxu0 0.0
        %530 = vmatpush1.msra.mxu0 0.0
        %531 = vmatprep.subr.mxu0 0.0
        %532 = vmatpush1.msra.mxu0 0.0
        %533 = vmatprep.subr.mxu0 0.0
        %534 = vmatpush1.msra.mxu0 0.0
        %535 = vmatprep.subr.mxu0 0.0
        %536 = vmatpush1.msra.mxu0 0.0
        %537 = vmatprep.subr.mxu0 0.0
        %538 = vmatpush1.msra.mxu0 0.0
        %539 = vmatprep.subr.mxu0 0.0
        %540 = vmatpush1.msra.mxu0 0.0
        %541 = vmatprep.subr.mxu0 0.0
        %542 = vmatpush1.msra.mxu0 0.0
        %543 = vmatprep.subr.mxu0 0.0
        %544 = vmatpush1.msra.mxu0 0.0
        %545 = vmatprep.subr.mxu0 0.0
        %546 = vmatpush1.msra.mxu0 0.0
        %547 = vmatprep.subr.mxu0 0.0
        %548 = vmatpush1.msra.mxu0 %v514
        %549 = vmatprep.subr.mxu0 0.0
        %550 = vmatpush1.msra.mxu0 %v513
        %551 = vmatprep.subr.mxu0 0.0
        %552 = vmatpush1.msra.mxu0 %v512
        %553 = vmatprep.subr.mxu0 0.0
        %554 = vmatpush1.msra.mxu0 %v511
        %555 = vmatprep.subr.mxu0 0.0
        %556 = vmatpush2.msra.mxu0 0.0
        %557 = vmatprep.subr.mxu0 0.0
        %558 = vmatpush2.msra.mxu0 0.0
        %559 = vmatprep.subr.mxu0 0.0
        %560 = vmatpush2.msra.mxu0 0.0
        %561 = vmatprep.subr.mxu0 0.0
        %562 = vmatpush2.msra.mxu0 0.0
        %563 = vmatprep.subr.mxu0 0.0
        %564 = vmatpush2.msra.mxu0 0.0
        %565 = vmatprep.subr.mxu0 0.0
        %566 = vmatpush2.msra.mxu0 0.0
        %567 = vmatprep.subr.mxu0 0.0
        %568 = vmatpush2.msra.mxu0 0.0
        %569 = vmatprep.subr.mxu0 0.0
        %570 = vmatpush2.msra.mxu0 0.0
        %571 = vmatprep.subr.mxu0 0.0
        %572 = vmatpush2.msra.mxu0 0.0
        %573 = vmatprep.subr.mxu0 0.0
        %574 = vmatpush2.msra.mxu0 0.0
        %575 = vmatprep.subr.mxu0 0.0
        %576 = vmatpush2.msra.mxu0 0.0
        %577 = vmatprep.subr.mxu0 0.0
        %578 = vmatpush2.msra.mxu0 0.0
        %579 = vmatprep.subr.mxu0 0.0
        %580 = vmatpush2.msra.mxu0 0.0
        %581 = vmatprep.subr.mxu0 0.0
        %582 = vmatpush2.msra.mxu0 0.0
        %583 = vmatprep.subr.mxu0 0.0
        %584 = vmatpush2.msra.mxu0 0.0
        %585 = vmatprep.subr.mxu0 0.0
        %586 = vmatpush2.msra.mxu0 0.0
        %587 = vmatprep.mubr.f32.mxu0 0.0
        %588 = vmatmul.mubr.f32.gmra.mxu0 %v521
        %v589 = vpop.f32.mrf.mxu0
        %v590 = vadd.f32 %v519, %v589
        %v591 = vpop.f32.mrf.mxu0
        %592 = vdwg.mxu0
        %594 = vrot.lane.b32.xlu0 %v510, 96
        %v595 = vpop.permute.xlu0 %594
        %vm596 = vcmask 64512
        %v598 = vsel %vm596, %v500, 0
        %v600 = vsel %vm596, %v595, 0
        %602 = vmatprep.subr.mxu0 0.0
        %603 = vmatpush1.xpose.msra.mxu0 0.0
        %604 = vmatprep.subr.mxu0 0.0
        %605 = vmatpush1.xpose.msra.mxu0 0.0
        %606 = vmatprep.subr.mxu0 0.0
        %607 = vmatpush1.xpose.msra.mxu0 0.0
        %608 = vmatprep.subr.mxu0 0.0
        %609 = vmatpush1.xpose.msra.mxu0 0.0
        %610 = vmatprep.subr.mxu0 0.0
        %611 = vmatpush1.xpose.msra.mxu0 0.0
        %612 = vmatprep.subr.mxu0 0.0
        %613 = vmatpush1.xpose.msra.mxu0 0.0
        %614 = vmatprep.subr.mxu0 0.0
        %615 = vmatpush1.xpose.msra.mxu0 0.0
        %616 = vmatprep.subr.mxu0 0.0
        %617 = vmatpush1.xpose.msra.mxu0 0.0
        %618 = vmatprep.subr.mxu0 0.0
        %619 = vmatpush1.xpose.msra.mxu0 0.0
        %620 = vmatprep.subr.mxu0 0.0
        %621 = vmatpush1.xpose.msra.mxu0 0.0
        %622 = vmatprep.subr.mxu0 0.0
        %623 = vmatpush1.xpose.msra.mxu0 0.0
        %624 = vmatprep.subr.mxu0 0.0
        %625 = vmatpush1.xpose.msra.mxu0 0.0
        %626 = vmatprep.subr.mxu0 0.0
        %627 = vmatpush1.xpose.msra.mxu0 0.0
        %628 = vmatprep.subr.mxu0 0.0
        %629 = vmatpush1.xpose.msra.mxu0 0.0
        %630 = vmatprep.subr.mxu0 0.0
        %631 = vmatpush1.xpose.msra.mxu0 0.0
        %632 = vmatprep.subr.mxu0 0.0
        %633 = vmatpush1.xpose.msra.mxu0 %v600
        %634 = vmatprep.subr.mxu0 0.0
        %635 = vmatpush2.xpose.msra.mxu0 0.0
        %636 = vmatprep.subr.mxu0 0.0
        %637 = vmatpush2.xpose.msra.mxu0 0.0
        %638 = vmatprep.subr.mxu0 0.0
        %639 = vmatpush2.xpose.msra.mxu0 0.0
        %640 = vmatprep.subr.mxu0 0.0
        %641 = vmatpush2.xpose.msra.mxu0 0.0
        %642 = vmatprep.subr.mxu0 0.0
        %643 = vmatpush2.xpose.msra.mxu0 0.0
        %644 = vmatprep.subr.mxu0 0.0
        %645 = vmatpush2.xpose.msra.mxu0 0.0
        %646 = vmatprep.subr.mxu0 0.0
        %647 = vmatpush2.xpose.msra.mxu0 0.0
        %648 = vmatprep.subr.mxu0 0.0
        %649 = vmatpush2.xpose.msra.mxu0 0.0
        %650 = vmatprep.subr.mxu0 0.0
        %651 = vmatpush2.xpose.msra.mxu0 0.0
        %652 = vmatprep.subr.mxu0 0.0
        %653 = vmatpush2.xpose.msra.mxu0 0.0
        %654 = vmatprep.subr.mxu0 0.0
        %655 = vmatpush2.xpose.msra.mxu0 0.0
        %656 = vmatprep.subr.mxu0 0.0
        %657 = vmatpush2.xpose.msra.mxu0 0.0
        %658 = vmatprep.subr.mxu0 0.0
        %659 = vmatpush2.xpose.msra.mxu0 0.0
        %660 = vmatprep.subr.mxu0 0.0
        %661 = vmatpush2.xpose.msra.mxu0 0.0
        %662 = vmatprep.subr.mxu0 0.0
        %663 = vmatpush2.xpose.msra.mxu0 0.0
        %664 = vmatprep.subr.mxu0 0.0
        %665 = vmatpush2.xpose.msra.mxu0 0.0
        %666 = vmatprep.mubr.f32.mxu0 0.0
        %667 = vmatmul.mubr.f32.gmra.mxu0 %v598
        %v668 = vpop.f32.mrf.mxu0
        %v669 = vadd.f32 0.0, %v668
        %v670 = vpop.f32.mrf.mxu0
        %671 = vdwg.mxu0
        %v672 = vsel %vm596, %v669, -inf
        %673 = vmax.xlane.f32.xlu0 %v672
        %v674 = vpop.xlane.xlu0 %673
        %v675 = vsub.f32 %v669, %v674
        %v676 = vmul.f32 %v675, 1.442695
        %v677 = vpow.pop %v676
        %v678 = vsel %vm596, %v677, 0.0
        %679 = vadd.xlane.f32.xlu0 %v678
        %v680 = vpop.xlane.xlu0 %679
        %v681 = vrcp.pop %v680
        %v682 = vmul.f32 %v677, %v681
        %v684 = vsel %vm596, %v682, 0
        %686 = vmatprep.subr.mxu0 0.0
        %687 = vmatpush1.msra.mxu0 0.0
        %688 = vmatprep.subr.mxu0 0.0
        %689 = vmatpush1.msra.mxu0 0.0
        %690 = vmatprep.subr.mxu0 0.0
        %691 = vmatpush1.msra.mxu0 0.0
        %692 = vmatprep.subr.mxu0 0.0
        %693 = vmatpush1.msra.mxu0 0.0
        %694 = vmatprep.subr.mxu0 0.0
        %695 = vmatpush1.msra.mxu0 0.0
        %696 = vmatprep.subr.mxu0 0.0
        %697 = vmatpush1.msra.mxu0 0.0
        %698 = vmatprep.subr.mxu0 0.0
        %699 = vmatpush1.msra.mxu0 0.0
        %700 = vmatprep.subr.mxu0 0.0
        %701 = vmatpush1.msra.mxu0 0.0
        %702 = vmatprep.subr.mxu0 0.0
        %703 = vmatpush1.msra.mxu0 0.0
        %704 = vmatprep.subr.mxu0 0.0
        %705 = vmatpush1.msra.mxu0 0.0
        %706 = vmatprep.subr.mxu0 0.0
        %707 = vmatpush1.msra.mxu0 0.0
        %708 = vmatprep.subr.mxu0 0.0
        %709 = vmatpush1.msra.mxu0 0.0
        %710 = vmatprep.subr.mxu0 0.0
        %711 = vmatpush1.msra.mxu0 0.0
        %712 = vmatprep.subr.mxu0 0.0
        %713 = vmatpush1.msra.mxu0 0.0
        %714 = vmatprep.subr.mxu0 0.0
        %715 = vmatpush1.msra.mxu0 0.0
        %716 = vmatprep.subr.mxu0 0.0
        %717 = vmatpush1.msra.mxu0 %v590
        %718 = vmatprep.subr.mxu0 0.0
        %719 = vmatpush2.msra.mxu0 0.0
        %720 = vmatprep.subr.mxu0 0.0
        %721 = vmatpush2.msra.mxu0 0.0
        %722 = vmatprep.subr.mxu0 0.0
        %723 = vmatpush2.msra.mxu0 0.0
        %724 = vmatprep.subr.mxu0 0.0
        %725 = vmatpush2.msra.mxu0 0.0
        %726 = vmatprep.subr.mxu0 0.0
        %727 = vmatpush2.msra.mxu0 0.0
        %728 = vmatprep.subr.mxu0 0.0
        %729 = vmatpush2.msra.mxu0 0.0
        %730 = vmatprep.subr.mxu0 0.0
        %731 = vmatpush2.msra.mxu0 0.0
        %732 = vmatprep.subr.mxu0 0.0
        %733 = vmatpush2.msra.mxu0 0.0
        %734 = vmatprep.subr.mxu0 0.0
        %735 = vmatpush2.msra.mxu0 0.0
        %736 = vmatprep.subr.mxu0 0.0
        %737 = vmatpush2.msra.mxu0 0.0
        %738 = vmatprep.subr.mxu0 0.0
        %739 = vmatpush2.msra.mxu0 0.0
        %740 = vmatprep.subr.mxu0 0.0
        %741 = vmatpush2.msra.mxu0 0.0
        %742 = vmatprep.subr.mxu0 0.0
        %743 = vmatpush2.msra.mxu0 0.0
        %744 = vmatprep.subr.mxu0 0.0
        %745 = vmatpush2.msra.mxu0 0.0
        %746 = vmatprep.subr.mxu0 0.0
        %747 = vmatpush2.msra.mxu0 0.0
        %748 = vmatprep.subr.mxu0 0.0
        %749 = vmatpush2.msra.mxu0 0.0
        %750 = vmatprep.mubr.f32.mxu0 0.0
        %751 = vmatmul.mubr.f32.gmra.mxu0 %v684
        %v752 = vpop.f32.mrf.mxu0
        %v753 = vadd.f32 0.0, %v752
        %v754 = vpop.f32.mrf.mxu0
        %755 = vdwg.mxu0
        %756 = vrot.lane.b32.xlu0 %v500, 120
        %v757 = vpop.permute.xlu0 %756
        %758 = vrot.lane.b32.xlu0 %v510, 88
        %v759 = vpop.permute.xlu0 %758
        %v760 = vsel %vm596, %v757, 0
        %v762 = vsel %vm596, %v759, 0
        %764 = vmatprep.subr.mxu0 0.0
        %765 = vmatpush1.xpose.msra.mxu0 0.0
        %766 = vmatprep.subr.mxu0 0.0
        %767 = vmatpush1.xpose.msra.mxu0 0.0
        %768 = vmatprep.subr.mxu0 0.0
        %769 = vmatpush1.xpose.msra.mxu0 0.0
        %770 = vmatprep.subr.mxu0 0.0
        %771 = vmatpush1.xpose.msra.mxu0 0.0
        %772 = vmatprep.subr.mxu0 0.0
        %773 = vmatpush1.xpose.msra.mxu0 0.0
        %774 = vmatprep.subr.mxu0 0.0
        %775 = vmatpush1.xpose.msra.mxu0 0.0
        %776 = vmatprep.subr.mxu0 0.0
        %777 = vmatpush1.xpose.msra.mxu0 0.0
        %778 = vmatprep.subr.mxu0 0.0
        %779 = vmatpush1.xpose.msra.mxu0 0.0
        %780 = vmatprep.subr.mxu0 0.0
        %781 = vmatpush1.xpose.msra.mxu0 0.0
        %782 = vmatprep.subr.mxu0 0.0
        %783 = vmatpush1.xpose.msra.mxu0 0.0
        %784 = vmatprep.subr.mxu0 0.0
        %785 = vmatpush1.xpose.msra.mxu0 0.0
        %786 = vmatprep.subr.mxu0 0.0
        %787 = vmatpush1.xpose.msra.mxu0 0.0
        %788 = vmatprep.subr.mxu0 0.0
        %789 = vmatpush1.xpose.msra.mxu0 0.0
        %790 = vmatprep.subr.mxu0 0.0
        %791 = vmatpush1.xpose.msra.mxu0 0.0
        %792 = vmatprep.subr.mxu0 0.0
        %793 = vmatpush1.xpose.msra.mxu0 0.0
        %794 = vmatprep.subr.mxu0 0.0
        %795 = vmatpush1.xpose.msra.mxu0 %v762
        %796 = vmatprep.subr.mxu0 0.0
        %797 = vmatpush2.xpose.msra.mxu0 0.0
        %798 = vmatprep.subr.mxu0 0.0
        %799 = vmatpush2.xpose.msra.mxu0 0.0
        %800 = vmatprep.subr.mxu0 0.0
        %801 = vmatpush2.xpose.msra.mxu0 0.0
        %802 = vmatprep.subr.mxu0 0.0
        %803 = vmatpush2.xpose.msra.mxu0 0.0
        %804 = vmatprep.subr.mxu0 0.0
        %805 = vmatpush2.xpose.msra.mxu0 0.0
        %806 = vmatprep.subr.mxu0 0.0
        %807 = vmatpush2.xpose.msra.mxu0 0.0
        %808 = vmatprep.subr.mxu0 0.0
        %809 = vmatpush2.xpose.msra.mxu0 0.0
        %810 = vmatprep.subr.mxu0 0.0
        %811 = vmatpush2.xpose.msra.mxu0 0.0
        %812 = vmatprep.subr.mxu0 0.0
        %813 = vmatpush2.xpose.msra.mxu0 0.0
        %814 = vmatprep.subr.mxu0 0.0
        %815 = vmatpush2.xpose.msra.mxu0 0.0
        %816 = vmatprep.subr.mxu0 0.0
        %817 = vmatpush2.xpose.msra.mxu0 0.0
        %818 = vmatprep.subr.mxu0 0.0
        %819 = vmatpush2.xpose.msra.mxu0 0.0
        %820 = vmatprep.subr.mxu0 0.0
        %821 = vmatpush2.xpose.msra.mxu0 0.0
        %822 = vmatprep.subr.mxu0 0.0
        %823 = vmatpush2.xpose.msra.mxu0 0.0
        %824 = vmatprep.subr.mxu0 0.0
        %825 = vmatpush2.xpose.msra.mxu0 0.0
        %826 = vmatprep.subr.mxu0 0.0
        %827 = vmatpush2.xpose.msra.mxu0 0.0
        %828 = vmatprep.mubr.f32.mxu0 0.0
        %829 = vmatmul.mubr.f32.gmra.mxu0 %v760
        %v830 = vpop.f32.mrf.mxu0
        %v831 = vadd.f32 0.0, %v830
        %v832 = vpop.f32.mrf.mxu0
        %833 = vdwg.mxu0
        %v834 = vsel %vm596, %v831, -inf
        %835 = vmax.xlane.f32.xlu0 %v834
        %v836 = vpop.xlane.xlu0 %835
        %v837 = vsub.f32 %v831, %v836
        %v838 = vmul.f32 %v837, 1.442695
        %v839 = vpow.pop %v838
        %v840 = vsel %vm596, %v839, 0.0
        %841 = vadd.xlane.f32.xlu0 %v840
        %v842 = vpop.xlane.xlu0 %841
        %v843 = vrcp.pop %v842
        %v844 = vmul.f32 %v839, %v843
        %846 = vrot.lane.b32.xlu0 %v590, 120
        %v847 = vpop.permute.xlu0 %846
        %v850 = vsel %vm596, %v844, 0
        %852 = vmatprep.subr.mxu0 0.0
        %853 = vmatpush1.msra.mxu0 0.0
        %854 = vmatprep.subr.mxu0 0.0
        %855 = vmatpush1.msra.mxu0 0.0
        %856 = vmatprep.subr.mxu0 0.0
        %857 = vmatpush1.msra.mxu0 0.0
        %858 = vmatprep.subr.mxu0 0.0
        %859 = vmatpush1.msra.mxu0 0.0
        %860 = vmatprep.subr.mxu0 0.0
        %861 = vmatpush1.msra.mxu0 0.0
        %862 = vmatprep.subr.mxu0 0.0
        %863 = vmatpush1.msra.mxu0 0.0
        %864 = vmatprep.subr.mxu0 0.0
        %865 = vmatpush1.msra.mxu0 0.0
        %866 = vmatprep.subr.mxu0 0.0
        %867 = vmatpush1.msra.mxu0 0.0
        %868 = vmatprep.subr.mxu0 0.0
        %869 = vmatpush1.msra.mxu0 0.0
        %870 = vmatprep.subr.mxu0 0.0
        %871 = vmatpush1.msra.mxu0 0.0
        %872 = vmatprep.subr.mxu0 0.0
        %873 = vmatpush1.msra.mxu0 0.0
        %874 = vmatprep.subr.mxu0 0.0
        %875 = vmatpush1.msra.mxu0 0.0
        %876 = vmatprep.subr.mxu0 0.0
        %877 = vmatpush1.msra.mxu0 0.0
        %878 = vmatprep.subr.mxu0 0.0
        %879 = vmatpush1.msra.mxu0 0.0
        %880 = vmatprep.subr.mxu0 0.0
        %881 = vmatpush1.msra.mxu0 0.0
        %882 = vmatprep.subr.mxu0 0.0
        %883 = vmatpush1.msra.mxu0 %v847
        %884 = vmatprep.subr.mxu0 0.0
        %885 = vmatpush2.msra.mxu0 0.0
        %886 = vmatprep.subr.mxu0 0.0
        %887 = vmatpush2.msra.mxu0 0.0
        %888 = vmatprep.subr.mxu0 0.0
        %889 = vmatpush2.msra.mxu0 0.0
        %890 = vmatprep.subr.mxu0 0.0
        %891 = vmatpush2.msra.mxu0 0.0
        %892 = vmatprep.subr.mxu0 0.0
        %893 = vmatpush2.msra.mxu0 0.0
        %894 = vmatprep.subr.mxu0 0.0
        %895 = vmatpush2.msra.mxu0 0.0
        %896 = vmatprep.subr.mxu0 0.0
        %897 = vmatpush2.msra.mxu0 0.0
        %898 = vmatprep.subr.mxu0 0.0
        %899 = vmatpush2.msra.mxu0 0.0
        %900 = vmatprep.subr.mxu0 0.0
        %901 = vmatpush2.msra.mxu0 0.0
        %902 = vmatprep.subr.mxu0 0.0
        %903 = vmatpush2.msra.mxu0 0.0
        %904 = vmatprep.subr.mxu0 0.0
        %905 = vmatpush2.msra.mxu0 0.0
        %906 = vmatprep.subr.mxu0 0.0
        %907 = vmatpush2.msra.mxu0 0.0
        %908 = vmatprep.subr.mxu0 0.0
        %909 = vmatpush2.msra.mxu0 0.0
        %910 = vmatprep.subr.mxu0 0.0
        %911 = vmatpush2.msra.mxu0 0.0
        %912 = vmatprep.subr.mxu0 0.0
        %913 = vmatpush2.msra.mxu0 0.0
        %914 = vmatprep.subr.mxu0 0.0
        %915 = vmatpush2.msra.mxu0 0.0
        %916 = vmatprep.mubr.f32.mxu0 0.0
        %917 = vmatmul.mubr.f32.gmra.mxu0 %v850
        %v918 = vpop.f32.mrf.mxu0
        %v919 = vadd.f32 0.0, %v918
        %v920 = vpop.f32.mrf.mxu0
        %921 = vdwg.mxu0
        %922 = vrot.lane.b32.xlu0 %v500, 112
        %v923 = vpop.permute.xlu0 %922
        %924 = vrot.lane.b32.xlu0 %v510, 80
        %v925 = vpop.permute.xlu0 %924
        %v926 = vsel %vm596, %v923, 0
        %v928 = vsel %vm596, %v925, 0
        %930 = vmatprep.subr.mxu0 0.0
        %931 = vmatpush1.xpose.msra.mxu0 0.0
        %932 = vmatprep.subr.mxu0 0.0
        %933 = vmatpush1.xpose.msra.mxu0 0.0
        %934 = vmatprep.subr.mxu0 0.0
        %935 = vmatpush1.xpose.msra.mxu0 0.0
        %936 = vmatprep.subr.mxu0 0.0
        %937 = vmatpush1.xpose.msra.mxu0 0.0
        %938 = vmatprep.subr.mxu0 0.0
        %939 = vmatpush1.xpose.msra.mxu0 0.0
        %940 = vmatprep.subr.mxu0 0.0
        %941 = vmatpush1.xpose.msra.mxu0 0.0
        %942 = vmatprep.subr.mxu0 0.0
        %943 = vmatpush1.xpose.msra.mxu0 0.0
        %944 = vmatprep.subr.mxu0 0.0
        %945 = vmatpush1.xpose.msra.mxu0 0.0
        %946 = vmatprep.subr.mxu0 0.0
        %947 = vmatpush1.xpose.msra.mxu0 0.0
        %948 = vmatprep.subr.mxu0 0.0
        %949 = vmatpush1.xpose.msra.mxu0 0.0
        %950 = vmatprep.subr.mxu0 0.0
        %951 = vmatpush1.xpose.msra.mxu0 0.0
        %952 = vmatprep.subr.mxu0 0.0
        %953 = vmatpush1.xpose.msra.mxu0 0.0
        %954 = vmatprep.subr.mxu0 0.0
        %955 = vmatpush1.xpose.msra.mxu0 0.0
        %956 = vmatprep.subr.mxu0 0.0
        %957 = vmatpush1.xpose.msra.mxu0 0.0
        %958 = vmatprep.subr.mxu0 0.0
        %959 = vmatpush1.xpose.msra.mxu0 0.0
        %960 = vmatprep.subr.mxu0 0.0
        %961 = vmatpush1.xpose.msra.mxu0 %v928
        %962 = vmatprep.subr.mxu0 0.0
        %963 = vmatpush2.xpose.msra.mxu0 0.0
        %964 = vmatprep.subr.mxu0 0.0
        %965 = vmatpush2.xpose.msra.mxu0 0.0
        %966 = vmatprep.subr.mxu0 0.0
        %967 = vmatpush2.xpose.msra.mxu0 0.0
        %968 = vmatprep.subr.mxu0 0.0
        %969 = vmatpush2.xpose.msra.mxu0 0.0
        %970 = vmatprep.subr.mxu0 0.0
        %971 = vmatpush2.xpose.msra.mxu0 0.0
        %972 = vmatprep.subr.mxu0 0.0
        %973 = vmatpush2.xpose.msra.mxu0 0.0
        %974 = vmatprep.subr.mxu0 0.0
        %975 = vmatpush2.xpose.msra.mxu0 0.0
        %976 = vmatprep.subr.mxu0 0.0
        %977 = vmatpush2.xpose.msra.mxu0 0.0
        %978 = vmatprep.subr.mxu0 0.0
        %979 = vmatpush2.xpose.msra.mxu0 0.0
        %980 = vmatprep.subr.mxu0 0.0
        %981 = vmatpush2.xpose.msra.mxu0 0.0
        %982 = vmatprep.subr.mxu0 0.0
        %983 = vmatpush2.xpose.msra.mxu0 0.0
        %984 = vmatprep.subr.mxu0 0.0
        %985 = vmatpush2.xpose.msra.mxu0 0.0
        %986 = vmatprep.subr.mxu0 0.0
        %987 = vmatpush2.xpose.msra.mxu0 0.0
        %988 = vmatprep.subr.mxu0 0.0
        %989 = vmatpush2.xpose.msra.mxu0 0.0
        %990 = vmatprep.subr.mxu0 0.0
        %991 = vmatpush2.xpose.msra.mxu0 0.0
        %992 = vmatprep.subr.mxu0 0.0
        %993 = vmatpush2.xpose.msra.mxu0 0.0
        %994 = vmatprep.mubr.f32.mxu0 0.0
        %995 = vmatmul.mubr.f32.gmra.mxu0 %v926
        %v996 = vpop.f32.mrf.mxu0
        %v997 = vadd.f32 0.0, %v996
        %v998 = vpop.f32.mrf.mxu0
        %999 = vdwg.mxu0
        %v1000 = vsel %vm596, %v997, -inf
        %1001 = vmax.xlane.f32.xlu0 %v1000
        %v1002 = vpop.xlane.xlu0 %1001
        %v1003 = vsub.f32 %v997, %v1002
        %v1004 = vmul.f32 %v1003, 1.442695
        %v1005 = vpow.pop %v1004
        %v1006 = vsel %vm596, %v1005, 0.0
        %1007 = vadd.xlane.f32.xlu0 %v1006
        %v1008 = vpop.xlane.xlu0 %1007
        %v1009 = vrcp.pop %v1008
        %v1010 = vmul.f32 %v1005, %v1009
        %1011 = vrot.lane.b32.xlu0 %v590, 112
        %v1012 = vpop.permute.xlu0 %1011
        %v1015 = vsel %vm596, %v1010, 0
        %1017 = vmatprep.subr.mxu0 0.0
        %1018 = vmatpush1.msra.mxu0 0.0
        %1019 = vmatprep.subr.mxu0 0.0
        %1020 = vmatpush1.msra.mxu0 0.0
        %1021 = vmatprep.subr.mxu0 0.0
        %1022 = vmatpush1.msra.mxu0 0.0
        %1023 = vmatprep.subr.mxu0 0.0
        %1024 = vmatpush1.msra.mxu0 0.0
        %1025 = vmatprep.subr.mxu0 0.0
        %1026 = vmatpush1.msra.mxu0 0.0
        %1027 = vmatprep.subr.mxu0 0.0
        %1028 = vmatpush1.msra.mxu0 0.0
        %1029 = vmatprep.subr.mxu0 0.0
        %1030 = vmatpush1.msra.mxu0 0.0
        %1031 = vmatprep.subr.mxu0 0.0
        %1032 = vmatpush1.msra.mxu0 0.0
        %1033 = vmatprep.subr.mxu0 0.0
        %1034 = vmatpush1.msra.mxu0 0.0
        %1035 = vmatprep.subr.mxu0 0.0
        %1036 = vmatpush1.msra.mxu0 0.0
        %1037 = vmatprep.subr.mxu0 0.0
        %1038 = vmatpush1.msra.mxu0 0.0
        %1039 = vmatprep.subr.mxu0 0.0
        %1040 = vmatpush1.msra.mxu0 0.0
        %1041 = vmatprep.subr.mxu0 0.0
        %1042 = vmatpush1.msra.mxu0 0.0
        %1043 = vmatprep.subr.mxu0 0.0
        %1044 = vmatpush1.msra.mxu0 0.0
        %1045 = vmatprep.subr.mxu0 0.0
        %1046 = vmatpush1.msra.mxu0 0.0
        %1047 = vmatprep.subr.mxu0 0.0
        %1048 = vmatpush1.msra.mxu0 %v1012
        %1049 = vmatprep.subr.mxu0 0.0
        %1050 = vmatpush2.msra.mxu0 0.0
        %1051 = vmatprep.subr.mxu0 0.0
        %1052 = vmatpush2.msra.mxu0 0.0
        %1053 = vmatprep.subr.mxu0 0.0
        %1054 = vmatpush2.msra.mxu0 0.0
        %1055 = vmatprep.subr.mxu0 0.0
        %1056 = vmatpush2.msra.mxu0 0.0
        %1057 = vmatprep.subr.mxu0 0.0
        %1058 = vmatpush2.msra.mxu0 0.0
        %1059 = vmatprep.subr.mxu0 0.0
        %1060 = vmatpush2.msra.mxu0 0.0
        %1061 = vmatprep.subr.mxu0 0.0
        %1062 = vmatpush2.msra.mxu0 0.0
        %1063 = vmatprep.subr.mxu0 0.0
        %1064 = vmatpush2.msra.mxu0 0.0
        %1065 = vmatprep.subr.mxu0 0.0
        %1066 = vmatpush2.msra.mxu0 0.0
        %1067 = vmatprep.subr.mxu0 0.0
        %1068 = vmatpush2.msra.mxu0 0.0
        %1069 = vmatprep.subr.mxu0 0.0
        %1070 = vmatpush2.msra.mxu0 0.0
        %1071 = vmatprep.subr.mxu0 0.0
        %1072 = vmatpush2.msra.mxu0 0.0
        %1073 = vmatprep.subr.mxu0 0.0
        %1074 = vmatpush2.msra.mxu0 0.0
        %1075 = vmatprep.subr.mxu0 0.0
        %1076 = vmatpush2.msra.mxu0 0.0
        %1077 = vmatprep.subr.mxu0 0.0
        %1078 = vmatpush2.msra.mxu0 0.0
        %1079 = vmatprep.subr.mxu0 0.0
        %1080 = vmatpush2.msra.mxu0 0.0
        %1081 = vmatprep.mubr.f32.mxu0 0.0
        %1082 = vmatmul.mubr.f32.gmra.mxu0 %v1015
        %v1083 = vpop.f32.mrf.mxu0
        %v1084 = vadd.f32 0.0, %v1083
        %v1085 = vpop.f32.mrf.mxu0
        %1086 = vdwg.mxu0
        %1087 = vrot.lane.b32.xlu0 %v500, 104
        %v1088 = vpop.permute.xlu0 %1087
        %1089 = vrot.lane.b32.xlu0 %v510, 72
        %v1090 = vpop.permute.xlu0 %1089
        %v1091 = vsel %vm596, %v1088, 0
        %v1093 = vsel %vm596, %v1090, 0
        %1095 = vmatprep.subr.mxu0 0.0
        %1096 = vmatpush1.xpose.msra.mxu0 0.0
        %1097 = vmatprep.subr.mxu0 0.0
        %1098 = vmatpush1.xpose.msra.mxu0 0.0
        %1099 = vmatprep.subr.mxu0 0.0
        %1100 = vmatpush1.xpose.msra.mxu0 0.0
        %1101 = vmatprep.subr.mxu0 0.0
        %1102 = vmatpush1.xpose.msra.mxu0 0.0
        %1103 = vmatprep.subr.mxu0 0.0
        %1104 = vmatpush1.xpose.msra.mxu0 0.0
        %1105 = vmatprep.subr.mxu0 0.0
        %1106 = vmatpush1.xpose.msra.mxu0 0.0
        %1107 = vmatprep.subr.mxu0 0.0
        %1108 = vmatpush1.xpose.msra.mxu0 0.0
        %1109 = vmatprep.subr.mxu0 0.0
        %1110 = vmatpush1.xpose.msra.mxu0 0.0
        %1111 = vmatprep.subr.mxu0 0.0
        %1112 = vmatpush1.xpose.msra.mxu0 0.0
        %1113 = vmatprep.subr.mxu0 0.0
        %1114 = vmatpush1.xpose.msra.mxu0 0.0
        %1115 = vmatprep.subr.mxu0 0.0
        %1116 = vmatpush1.xpose.msra.mxu0 0.0
        %1117 = vmatprep.subr.mxu0 0.0
        %1118 = vmatpush1.xpose.msra.mxu0 0.0
        %1119 = vmatprep.subr.mxu0 0.0
        %1120 = vmatpush1.xpose.msra.mxu0 0.0
        %1121 = vmatprep.subr.mxu0 0.0
        %1122 = vmatpush1.xpose.msra.mxu0 0.0
        %1123 = vmatprep.subr.mxu0 0.0
        %1124 = vmatpush1.xpose.msra.mxu0 0.0
        %1125 = vmatprep.subr.mxu0 0.0
        %1126 = vmatpush1.xpose.msra.mxu0 %v1093
        %1127 = vmatprep.subr.mxu0 0.0
        %1128 = vmatpush2.xpose.msra.mxu0 0.0
        %1129 = vmatprep.subr.mxu0 0.0
        %1130 = vmatpush2.xpose.msra.mxu0 0.0
        %1131 = vmatprep.subr.mxu0 0.0
        %1132 = vmatpush2.xpose.msra.mxu0 0.0
        %1133 = vmatprep.subr.mxu0 0.0
        %1134 = vmatpush2.xpose.msra.mxu0 0.0
        %1135 = vmatprep.subr.mxu0 0.0
        %1136 = vmatpush2.xpose.msra.mxu0 0.0
        %1137 = vmatprep.subr.mxu0 0.0
        %1138 = vmatpush2.xpose.msra.mxu0 0.0
        %1139 = vmatprep.subr.mxu0 0.0
        %1140 = vmatpush2.xpose.msra.mxu0 0.0
        %1141 = vmatprep.subr.mxu0 0.0
        %1142 = vmatpush2.xpose.msra.mxu0 0.0
        %1143 = vmatprep.subr.mxu0 0.0
        %1144 = vmatpush2.xpose.msra.mxu0 0.0
        %1145 = vmatprep.subr.mxu0 0.0
        %1146 = vmatpush2.xpose.msra.mxu0 0.0
        %1147 = vmatprep.subr.mxu0 0.0
        %1148 = vmatpush2.xpose.msra.mxu0 0.0
        %1149 = vmatprep.subr.mxu0 0.0
        %1150 = vmatpush2.xpose.msra.mxu0 0.0
        %1151 = vmatprep.subr.mxu0 0.0
        %1152 = vmatpush2.xpose.msra.mxu0 0.0
        %1153 = vmatprep.subr.mxu0 0.0
        %1154 = vmatpush2.xpose.msra.mxu0 0.0
        %1155 = vmatprep.subr.mxu0 0.0
        %1156 = vmatpush2.xpose.msra.mxu0 0.0
        %1157 = vmatprep.subr.mxu0 0.0
        %1158 = vmatpush2.xpose.msra.mxu0 0.0
        %1159 = vmatprep.mubr.f32.mxu0 0.0
        %1160 = vmatmul.mubr.f32.gmra.mxu0 %v1091
        %v1161 = vpop.f32.mrf.mxu0
        %v1162 = vadd.f32 0.0, %v1161
        %v1163 = vpop.f32.mrf.mxu0
        %1164 = vdwg.mxu0
        %v1165 = vsel %vm596, %v1162, -inf
        %1166 = vmax.xlane.f32.xlu0 %v1165
        %v1167 = vpop.xlane.xlu0 %1166
        %v1168 = vsub.f32 %v1162, %v1167
        %v1169 = vmul.f32 %v1168, 1.442695
        %v1170 = vpow.pop %v1169
        %v1171 = vsel %vm596, %v1170, 0.0
        %1172 = vadd.xlane.f32.xlu0 %v1171
        %v1173 = vpop.xlane.xlu0 %1172
        %v1174 = vrcp.pop %v1173
        %v1175 = vmul.f32 %v1170, %v1174
        %1176 = vrot.lane.b32.xlu0 %v590, 104
        %v1177 = vpop.permute.xlu0 %1176
        %v1180 = vsel %vm596, %v1175, 0
        %1182 = vmatprep.subr.mxu0 0.0
        %1183 = vmatpush1.msra.mxu0 0.0
        %1184 = vmatprep.subr.mxu0 0.0
        %1185 = vmatpush1.msra.mxu0 0.0
        %1186 = vmatprep.subr.mxu0 0.0
        %1187 = vmatpush1.msra.mxu0 0.0
        %1188 = vmatprep.subr.mxu0 0.0
        %1189 = vmatpush1.msra.mxu0 0.0
        %1190 = vmatprep.subr.mxu0 0.0
        %1191 = vmatpush1.msra.mxu0 0.0
        %1192 = vmatprep.subr.mxu0 0.0
        %1193 = vmatpush1.msra.mxu0 0.0
        %1194 = vmatprep.subr.mxu0 0.0
        %1195 = vmatpush1.msra.mxu0 0.0
        %1196 = vmatprep.subr.mxu0 0.0
        %1197 = vmatpush1.msra.mxu0 0.0
        %1198 = vmatprep.subr.mxu0 0.0
        %1199 = vmatpush1.msra.mxu0 0.0
        %1200 = vmatprep.subr.mxu0 0.0
        %1201 = vmatpush1.msra.mxu0 0.0
        %1202 = vmatprep.subr.mxu0 0.0
        %1203 = vmatpush1.msra.mxu0 0.0
        %1204 = vmatprep.subr.mxu0 0.0
        %1205 = vmatpush1.msra.mxu0 0.0
        %1206 = vmatprep.subr.mxu0 0.0
        %1207 = vmatpush1.msra.mxu0 0.0
        %1208 = vmatprep.subr.mxu0 0.0
        %1209 = vmatpush1.msra.mxu0 0.0
        %1210 = vmatprep.subr.mxu0 0.0
        %1211 = vmatpush1.msra.mxu0 0.0
        %1212 = vmatprep.subr.mxu0 0.0
        %1213 = vmatpush1.msra.mxu0 %v1177
        %1214 = vmatprep.subr.mxu0 0.0
        %1215 = vmatpush2.msra.mxu0 0.0
        %1216 = vmatprep.subr.mxu0 0.0
        %1217 = vmatpush2.msra.mxu0 0.0
        %1218 = vmatprep.subr.mxu0 0.0
        %1219 = vmatpush2.msra.mxu0 0.0
        %1220 = vmatprep.subr.mxu0 0.0
        %1221 = vmatpush2.msra.mxu0 0.0
        %1222 = vmatprep.subr.mxu0 0.0
        %1223 = vmatpush2.msra.mxu0 0.0
        %1224 = vmatprep.subr.mxu0 0.0
        %1225 = vmatpush2.msra.mxu0 0.0
        %1226 = vmatprep.subr.mxu0 0.0
        %1227 = vmatpush2.msra.mxu0 0.0
        %1228 = vmatprep.subr.mxu0 0.0
        %1229 = vmatpush2.msra.mxu0 0.0
        %1230 = vmatprep.subr.mxu0 0.0
        %1231 = vmatpush2.msra.mxu0 0.0
        %1232 = vmatprep.subr.mxu0 0.0
        %1233 = vmatpush2.msra.mxu0 0.0
        %1234 = vmatprep.subr.mxu0 0.0
        %1235 = vmatpush2.msra.mxu0 0.0
        %1236 = vmatprep.subr.mxu0 0.0
        %1237 = vmatpush2.msra.mxu0 0.0
        %1238 = vmatprep.subr.mxu0 0.0
        %1239 = vmatpush2.msra.mxu0 0.0
        %1240 = vmatprep.subr.mxu0 0.0
        %1241 = vmatpush2.msra.mxu0 0.0
        %1242 = vmatprep.subr.mxu0 0.0
        %1243 = vmatpush2.msra.mxu0 0.0
        %1244 = vmatprep.subr.mxu0 0.0
        %1245 = vmatpush2.msra.mxu0 0.0
        %1246 = vmatprep.mubr.f32.mxu0 0.0
        %1247 = vmatmul.mubr.f32.gmra.mxu0 %v1180
        %v1248 = vpop.f32.mrf.mxu0
        %v1249 = vadd.f32 0.0, %v1248
        %v1250 = vpop.f32.mrf.mxu0
        %1251 = vdwg.mxu0
        %1253 = vrot.lane.b32.xlu0 %v919, 8
        %v1254 = vpop.permute.xlu0 %1253
        %1257 = vrot.lane.b32.xlu0 %v1084, 16
        %v1258 = vpop.permute.xlu0 %1257
        %1261 = vrot.lane.b32.xlu0 %v1249, 24
        %v1262 = vpop.permute.xlu0 %1261
        %v1264 = vsel %vm596, %v753, %v1254
        %vm1265 = vcmask 130048
        %v1266 = vsel %vm1265, %v1264, %v1258
        %vm1267 = vcmask 195584
        %v1268 = vsel %vm1267, %v1266, %v1262
        %v1269 = vld [vmem:[%s4] sm:$0xff]
        %v1270 = vld [vmem:[%s4 + $0x8] sm:$0xff]
        %v1271 = vld [vmem:[%s4 + $0x10] sm:$0xff]
        %v1272 = vld [vmem:[%s4 + $0x18] sm:$0xff]
        %v1273 = vld [vmem:[#allocation8 + $0x3] sm:$0x1]
        %v1274 = vlaneseq
        %v1275 = vshrl.u32 %v1274, 7
        %v1276 = vsub.s32 0, %v1275
        %v1277 = vrot.slane %v1273, %v1276
        %v1279 = vsel %vm421, %v1268, 0
        %1281 = vmatprep.subr.mxu0 0.0
        %1282 = vmatpush1.msra.mxu0 0.0
        %1283 = vmatprep.subr.mxu0 0.0
        %1284 = vmatpush1.msra.mxu0 0.0
        %1285 = vmatprep.subr.mxu0 0.0
        %1286 = vmatpush1.msra.mxu0 0.0
        %1287 = vmatprep.subr.mxu0 0.0
        %1288 = vmatpush1.msra.mxu0 0.0
        %1289 = vmatprep.subr.mxu0 0.0
        %1290 = vmatpush1.msra.mxu0 0.0
        %1291 = vmatprep.subr.mxu0 0.0
        %1292 = vmatpush1.msra.mxu0 0.0
        %1293 = vmatprep.subr.mxu0 0.0
        %1294 = vmatpush1.msra.mxu0 0.0
        %1295 = vmatprep.subr.mxu0 0.0
        %1296 = vmatpush1.msra.mxu0 0.0
        %1297 = vmatprep.subr.mxu0 0.0
        %1298 = vmatpush1.msra.mxu0 0.0
        %1299 = vmatprep.subr.mxu0 0.0
        %1300 = vmatpush1.msra.mxu0 0.0
        %1301 = vmatprep.subr.mxu0 0.0
        %1302 = vmatpush1.msra.mxu0 0.0
        %1303 = vmatprep.subr.mxu0 0.0
        %1304 = vmatpush1.msra.mxu0 0.0
        %1305 = vmatprep.subr.mxu0 0.0
        %1306 = vmatpush1.msra.mxu0 %v1272
        %1307 = vmatprep.subr.mxu0 0.0
        %1308 = vmatpush1.msra.mxu0 %v1271
        %1309 = vmatprep.subr.mxu0 0.0
        %1310 = vmatpush1.msra.mxu0 %v1270
        %1311 = vmatprep.subr.mxu0 0.0
        %1312 = vmatpush1.msra.mxu0 %v1269
        %1313 = vmatprep.subr.mxu0 0.0
        %1314 = vmatpush2.msra.mxu0 0.0
        %1315 = vmatprep.subr.mxu0 0.0
        %1316 = vmatpush2.msra.mxu0 0.0
        %1317 = vmatprep.subr.mxu0 0.0
        %1318 = vmatpush2.msra.mxu0 0.0
        %1319 = vmatprep.subr.mxu0 0.0
        %1320 = vmatpush2.msra.mxu0 0.0
        %1321 = vmatprep.subr.mxu0 0.0
        %1322 = vmatpush2.msra.mxu0 0.0
        %1323 = vmatprep.subr.mxu0 0.0
        %1324 = vmatpush2.msra.mxu0 0.0
        %1325 = vmatprep.subr.mxu0 0.0
        %1326 = vmatpush2.msra.mxu0 0.0
        %1327 = vmatprep.subr.mxu0 0.0
        %1328 = vmatpush2.msra.mxu0 0.0
        %1329 = vmatprep.subr.mxu0 0.0
        %1330 = vmatpush2.msra.mxu0 0.0
        %1331 = vmatprep.subr.mxu0 0.0
        %1332 = vmatpush2.msra.mxu0 0.0
        %1333 = vmatprep.subr.mxu0 0.0
        %1334 = vmatpush2.msra.mxu0 0.0
        %1335 = vmatprep.subr.mxu0 0.0
        %1336 = vmatpush2.msra.mxu0 0.0
        %1337 = vmatprep.subr.mxu0 0.0
        %1338 = vmatpush2.msra.mxu0 0.0
        %1339 = vmatprep.subr.mxu0 0.0
        %1340 = vmatpush2.msra.mxu0 0.0
        %1341 = vmatprep.subr.mxu0 0.0
        %1342 = vmatpush2.msra.mxu0 0.0
        %1343 = vmatprep.subr.mxu0 0.0
        %1344 = vmatpush2.msra.mxu0 0.0
        %1345 = vmatprep.mubr.f32.mxu0 0.0
        %1346 = vmatmul.mubr.f32.gmra.mxu0 %v1279
        %v1347 = vpop.f32.mrf.mxu0
        %v1348 = vadd.f32 %v1277, %v1347
        %v1349 = vpop.f32.mrf.mxu0
        %1350 = vdwg.mxu0
        %v1351 = vadd.f32 %v414, %v1348
        %v1352 = vld [vmem:[#allocation8 + $0x4] sm:$0x1]
        %v1353 = vld [vmem:[#allocation8 + $0x5] sm:$0x1]
        %v1354 = vsel %vm421, %v1351, 0.0
        %1355 = vadd.xlane.f32.xlu0 %v1354
        %v1356 = vpop.xlane.xlu0 %1355
        %v1357 = vrcp.pop 32.0
        %v1358 = vmul.f32 %v1356, %v1357
        %v1359 = vsub.f32 %v1351, %v1358
        %v1360 = vmul.f32 %v1359, %v1359
        %v1361 = vsel %vm421, %v1360, 0.0
        %1362 = vadd.xlane.f32.xlu0 %v1361
        %v1363 = vpop.xlane.xlu0 %1362
        %v1364 = vmul.f32 %v1363, %v1357
        %v1365 = vadd.f32 %v1364, 1e-05
        %v1366 = vrsqrt.pop %v1365
        %v1367 = vmul.f32 %v1359, %v1366
        %v1368 = vlaneseq
        %v1369 = vshrl.u32 %v1368, 7
        %v1370 = vsub.s32 0, %v1369
        %v1371 = vrot.slane %v1352, %v1370
        %v1372 = vmul.f32 %v1367, %v1371
        %v1373 = vlaneseq
        %v1374 = vshrl.u32 %v1373, 7
        %v1375 = vsub.s32 0, %v1374
        %v1376 = vrot.slane %v1353, %v1375
        %v1377 = vadd.f32 %v1372, %v1376
        %v1378 = vld [vmem:[#allocation7] sm:$0xff]
        %v1379 = vld [vmem:[#allocation7 + $0x8] sm:$0xff]
        %v1380 = vld [vmem:[#allocation7 + $0x10] sm:$0xff]
        %v1381 = vld [vmem:[#allocation7 + $0x18] sm:$0xff]
        %v1382 = vld [vmem:[%s6] sm:$0x1]
        %v1384 = vlaneseq
        %v1385 = vshrl.u32 %v1384, 7
        %v1386 = vsub.s32 0, %v1385
        %v1387 = vrot.slane %v1382, %v1386
        %v1390 = vsel %vm421, %v1377, 0
        %1392 = vmatprep.subr.mxu0 0.0
        %1393 = vmatpush1.msra.mxu0 0.0
        %1394 = vmatprep.subr.mxu0 0.0
        %1395 = vmatpush1.msra.mxu0 0.0
        %1396 = vmatprep.subr.mxu0 0.0
        %1397 = vmatpush1.msra.mxu0 0.0
        %1398 = vmatprep.subr.mxu0 0.0
        %1399 = vmatpush1.msra.mxu0 0.0
        %1400 = vmatprep.subr.mxu0 0.0
        %1401 = vmatpush1.msra.mxu0 0.0
        %1402 = vmatprep.subr.mxu0 0.0
        %1403 = vmatpush1.msra.mxu0 0.0
        %1404 = vmatprep.subr.mxu0 0.0
        %1405 = vmatpush1.msra.mxu0 0.0
        %1406 = vmatprep.subr.mxu0 0.0
        %1407 = vmatpush1.msra.mxu0 0.0
        %1408 = vmatprep.subr.mxu0 0.0
        %1409 = vmatpush1.msra.mxu0 0.0
        %1410 = vmatprep.subr.mxu0 0.0
        %1411 = vmatpush1.msra.mxu0 0.0
        %1412 = vmatprep.subr.mxu0 0.0
        %1413 = vmatpush1.msra.mxu0 0.0
        %1414 = vmatprep.subr.mxu0 0.0
        %1415 = vmatpush1.msra.mxu0 0.0
        %1416 = vmatprep.subr.mxu0 0.0
        %1417 = vmatpush1.msra.mxu0 %v1381
        %1418 = vmatprep.subr.mxu0 0.0
        %1419 = vmatpush1.msra.mxu0 %v1380
        %1420 = vmatprep.subr.mxu0 0.0
        %1421 = vmatpush1.msra.mxu0 %v1379
        %1422 = vmatprep.subr.mxu0 0.0
        %1423 = vmatpush1.msra.mxu0 %v1378
        %1424 = vmatprep.subr.mxu0 0.0
        %1425 = vmatpush2.msra.mxu0 0.0
        %1426 = vmatprep.subr.mxu0 0.0
        %1427 = vmatpush2.msra.mxu0 0.0
        %1428 = vmatprep.subr.mxu0 0.0
        %1429 = vmatpush2.msra.mxu0 0.0
        %1430 = vmatprep.subr.mxu0 0.0
        %1431 = vmatpush2.msra.mxu0 0.0
        %1432 = vmatprep.subr.mxu0 0.0
        %1433 = vmatpush2.msra.mxu0 0.0
        %1434 = vmatprep.subr.mxu0 0.0
        %1435 = vmatpush2.msra.mxu0 0.0
        %1436 = vmatprep.subr.mxu0 0.0
        %1437 = vmatpush2.msra.mxu0 0.0
        %1438 = vmatprep.subr.mxu0 0.0
        %1439 = vmatpush2.msra.mxu0 0.0
        %1440 = vmatprep.subr.mxu0 0.0
        %1441 = vmatpush2.msra.mxu0 0.0
        %1442 = vmatprep.subr.mxu0 0.0
        %1443 = vmatpush2.msra.mxu0 0.0
        %1444 = vmatprep.subr.mxu0 0.0
        %1445 = vmatpush2.msra.mxu0 0.0
        %1446 = vmatprep.subr.mxu0 0.0
        %1447 = vmatpush2.msra.mxu0 0.0
        %1448 = vmatprep.subr.mxu0 0.0
        %1449 = vmatpush2.msra.mxu0 0.0
        %1450 = vmatprep.subr.mxu0 0.0
        %1451 = vmatpush2.msra.mxu0 0.0
        %1452 = vmatprep.subr.mxu0 0.0
        %1453 = vmatpush2.msra.mxu0 0.0
        %1454 = vmatprep.subr.mxu0 0.0
        %1455 = vmatpush2.msra.mxu0 0.0
        %1456 = vmatprep.mubr.f32.mxu0 0.0
        %1457 = vmatmul.mubr.f32.gmra.mxu0 %v1390
        %v1458 = vpop.f32.mrf.mxu0
        %v1459 = vadd.f32 %v1387, %v1458
        %v1460 = vpop.f32.mrf.mxu0
        %1461 = vdwg.mxu0
        %v1462 = vmax.f32 %v1459, 0.0
        %v1463 = vld [vmem:[%s7] sm:$0xff]
        %v1464 = vld [vmem:[%s7 + $0x8] sm:$0xff]
        %v1465 = vld [vmem:[%s7 + $0x10] sm:$0xff]
        %v1466 = vld [vmem:[%s7 + $0x18] sm:$0xff]
        %v1467 = vld [vmem:[%s7 + $0x20] sm:$0xff]
        %v1468 = vld [vmem:[%s7 + $0x28] sm:$0xff]
        %v1469 = vld [vmem:[%s7 + $0x30] sm:$0xff]
        %v1470 = vld [vmem:[%s7 + $0x38] sm:$0xff]
        %v1471 = vld [vmem:[#allocation8 + $0x6] sm:$0x1]
        %v1472 = vlaneseq
        %v1473 = vshrl.u32 %v1472, 7
        %v1474 = vsub.s32 0, %v1473
        %v1475 = vrot.slane %v1471, %v1474
        %vm1476 = vcmask 523264
        %v1478 = vsel %vm1476, %v1462, 0
        %1480 = vmatprep.subr.mxu0 0.0
        %1481 = vmatpush1.msra.mxu0 0.0
        %1482 = vmatprep.subr.mxu0 0.0
        %1483 = vmatpush1.msra.mxu0 0.0
        %1484 = vmatprep.subr.mxu0 0.0
        %1485 = vmatpush1.msra.mxu0 0.0
        %1486 = vmatprep.subr.mxu0 0.0
        %1487 = vmatpush1.msra.mxu0 0.0
        %1488 = vmatprep.subr.mxu0 0.0
        %1489 = vmatpush1.msra.mxu0 0.0
        %1490 = vmatprep.subr.mxu0 0.0
        %1491 = vmatpush1.msra.mxu0 0.0
        %1492 = vmatprep.subr.mxu0 0.0
        %1493 = vmatpush1.msra.mxu0 0.0
        %1494 = vmatprep.subr.mxu0 0.0
        %1495 = vmatpush1.msra.mxu0 0.0
        %1496 = vmatprep.subr.mxu0 0.0
        %1497 = vmatpush1.msra.mxu0 %v1470
        %1498 = vmatprep.subr.mxu0 0.0
        %1499 = vmatpush1.msra.mxu0 %v1469
        %1500 = vmatprep.subr.mxu0 0.0
        %1501 = vmatpush1.msra.mxu0 %v1468
        %1502 = vmatprep.subr.mxu0 0.0
        %1503 = vmatpush1.msra.mxu0 %v1467
        %1504 = vmatprep.subr.mxu0 0.0
        %1505 = vmatpush1.msra.mxu0 %v1466
        %1506 = vmatprep.subr.mxu0 0.0
        %1507 = vmatpush1.msra.mxu0 %v1465
        %1508 = vmatprep.subr.mxu0 0.0
        %1509 = vmatpush1.msra.mxu0 %v1464
        %1510 = vmatprep.subr.mxu0 0.0
        %1511 = vmatpush1.msra.mxu0 %v1463
        %1512 = vmatprep.subr.mxu0 0.0
        %1513 = vmatpush2.msra.mxu0 0.0
        %1514 = vmatprep.subr.mxu0 0.0
        %1515 = vmatpush2.msra.mxu0 0.0
        %1516 = vmatprep.subr.mxu0 0.0
        %1517 = vmatpush2.msra.mxu0 0.0
        %1518 = vmatprep.subr.mxu0 0.0
        %1519 = vmatpush2.msra.mxu0 0.0
        %1520 = vmatprep.subr.mxu0 0.0
        %1521 = vmatpush2.msra.mxu0 0.0
        %1522 = vmatprep.subr.mxu0 0.0
        %1523 = vmatpush2.msra.mxu0 0.0
        %1524 = vmatprep.subr.mxu0 0.0
        %1525 = vmatpush2.msra.mxu0 0.0
        %1526 = vmatprep.subr.mxu0 0.0
        %1527 = vmatpush2.msra.mxu0 0.0
        %1528 = vmatprep.subr.mxu0 0.0
        %1529 = vmatpush2.msra.mxu0 0.0
        %1530 = vmatprep.subr.mxu0 0.0
        %1531 = vmatpush2.msra.mxu0 0.0
        %1532 = vmatprep.subr.mxu0 0.0
        %1533 = vmatpush2.msra.mxu0 0.0
        %1534 = vmatprep.subr.mxu0 0.0
        %1535 = vmatpush2.msra.mxu0 0.0
        %1536 = vmatprep.subr.mxu0 0.0
        %1537 = vmatpush2.msra.mxu0 0.0
        %1538 = vmatprep.subr.mxu0 0.0
        %1539 = vmatpush2.msra.mxu0 0.0
        %1540 = vmatprep.subr.mxu0 0.0
        %1541 = vmatpush2.msra.mxu0 0.0
        %1542 = vmatprep.subr.mxu0 0.0
        %1543 = vmatpush2.msra.mxu0 0.0
        %1544 = vmatprep.mubr.f32.mxu0 0.0
        %1545 = vmatmul.mubr.f32.gmra.mxu0 %v1478
        %v1546 = vpop.f32.mrf.mxu0
        %v1547 = vadd.f32 %v1475, %v1546
        %v1548 = vpop.f32.mrf.mxu0
        %1549 = vdwg.mxu0
        %v1550 = vadd.f32 %v1377, %v1547
        %v1551 = vld [vmem:[#allocation8 + $0x7] sm:$0x1]
        %v1552 = vld [vmem:[#allocation8 + $0x8] sm:$0x1]
        %v1553 = vsel %vm421, %v1550, 0.0
        %1554 = vadd.xlane.f32.xlu0 %v1553
        %v1555 = vpop.xlane.xlu0 %1554
        %v1556 = vmul.f32 %v1555, %v1357
        %v1557 = vsub.f32 %v1550, %v1556
        %v1558 = vmul.f32 %v1557, %v1557
        %v1559 = vsel %vm421, %v1558, 0.0
        %1560 = vadd.xlane.f32.xlu0 %v1559
        %v1561 = vpop.xlane.xlu0 %1560
        %v1562 = vmul.f32 %v1561, %v1357
        %v1563 = vadd.f32 %v1562, 1e-05
        %v1564 = vrsqrt.pop %v1563
        %v1565 = vmul.f32 %v1557, %v1564
        %v1566 = vlaneseq
        %v1567 = vshrl.u32 %v1566, 7
        %v1568 = vsub.s32 0, %v1567
        %v1569 = vrot.slane %v1551, %v1568
        %v1570 = vmul.f32 %v1565, %v1569
        %v1571 = vlaneseq
        %v1572 = vshrl.u32 %v1571, 7
        %v1573 = vsub.s32 0, %v1572
        %v1574 = vrot.slane %v1552, %v1573
        %v1575 = vadd.f32 %v1570, %v1574
        %1576 = vst.msk [vmem:[%s413] sm:$0xff] %vm421, %v1575
        %s1577 = sand.u32 %s237, 1
        %s1578 = scalar_lea.sflag [#allocation4], %s1577
        %s1579 = sand.u32 %s237, 1
        %s1580 = smul.addr %s1579, 8
        %s1581 = scalar_lea.vmem [#allocation10], %s1580
        // Predicated region
        $region73: #{tpu_custom_call.1} parent=55 // pred_check
          %p1582 = pneg %p247
        $region74: #{tpu_custom_call.1} parent=55 // pred_check_branch
          %1584 = sbr.rel (%p1582) target = $region76
        $region75: #{tpu_custom_call.1} parent=55 // pred_region
          %s1586 = ssub.s32 128, 128
          %1587 = vsyncadd %s1578, %s1586
          %s1588 = smul.addr %s30, 128
          %s1589 = scalar_lea.hbm %s9, %s1588
          %s1591 = sshll.u32 %s1581, 4
          %s1592 = int_to_ptr.vmem [resolvable:$true] %s1591
          %1594 = dma.vmem_to_hbm [thread:$0]  %s1592, 128, %s1589, %s1578
        $region76: #{tpu_custom_call.1} parent=55 // pred_fallthru
          _
      $region56: #{tpu_custom_call.1} parent=5 // pred_fallthru
        _
      %p1595 = scmp.le.s32.totalorder 2, %s25
      // Predicated region
      $region77: #{tpu_custom_call.1} parent=5 // pred_check
        %p1596 = pneg %p1595
      $region78: #{tpu_custom_call.1} parent=5 // pred_check_branch
        %1598 = sbr.rel (%p1596) target = $region80
      $region79: #{tpu_custom_call.1} parent=5 // pred_region
        %s1599 = ssub.s32 %s25, 2
        // Predicated region
        $region81: #{tpu_custom_call.1} parent=79 // pred_check
          %p1600 = pneg %p253
        $region82: #{tpu_custom_call.1} parent=79 // pred_check_branch
          %1602 = sbr.rel (%p1600) target = $region84
        $region83: #{tpu_custom_call.1} parent=79 // pred_region
          %s1603 = sand.u32 %s238, 1
          %s1604 = scalar_lea.sflag [#allocation4], %s1603
          %s1605 = sand.u32 %s238, 1
          %s1606 = smul.addr %s1605, 8
          %s1607 = scalar_lea.vmem [#allocation10], %s1606
          %1608 = dma.done %s1604, 128
        $region84: #{tpu_custom_call.1} parent=79 // pred_fallthru
          _
      $region80: #{tpu_custom_call.1} parent=5 // pred_fallthru
        _
    $region6: #{tpu_custom_call.1} parent=1 // loop_footer
      %s29 = sadd.s32 1, %s25
    $region7: #{tpu_custom_call.1} parent=1 // loop_footer_branch
      %24 = sbr.rel target = $region3
    $region8: #{tpu_custom_call.1} parent=1 // loop_exit
      _
    %1609 = vsyncpa [#allocation3], 1
    %s1610 = scalar_lea.sflag [#allocation3], 1
    %1611 = vsyncpa %s1610, 1
    %1612 = vsyncpa [#allocation6], 1
    %s1613 = scalar_lea.sflag [#allocation6], 1
    %1614 = vsyncpa %s1613, 1
    %1615 = vsyncpa [#allocation9], 1
    %1616 = vsyncpa [#allocation4], 1
    %s1617 = scalar_lea.sflag [#allocation4], 1
    %1618 = vsyncpa %s1617, 1

</llo_original>
